<compile_context>
chip_gen: v7x
topology: tpu7x:2x2x1
jax: 0.10.0
libtpu: 0.0.40
codegen_flags: <defaults>
</compile_context>

<pallas_src>
import functools

import jax
import jax.numpy as jnp
import numpy as np
from jax.experimental import pallas as pl
from jax.experimental.pallas import tpu as pltpu

LANES = 128


def _round_up(x, m):
    return (x + m - 1) // m * m


def _pad_axis(a, axis, new_size):
    pad = new_size - a.shape[axis]
    if pad == 0:
        return a
    cfg = [(0, 0)] * a.ndim
    cfg[axis] = (0, pad)
    return jnp.pad(a, cfg)


def _pick_batch_tile(N, m_spatial, target_m=256):
    """Smallest divisor TB of N with TB*m_spatial >= target_m, while keeping
    >= 2 grid steps whenever N >= 2 (megacore / 2-TC chips)."""
    divs = [d for d in range(1, N + 1) if N % d == 0]
    allowed = [d for d in divs if N < 2 or N // d >= 2] or [1]
    tb = allowed[0]
    for d in allowed:
        tb = d
        if d * m_spatial >= target_m:
            break
    return tb


# ----------------------------------------------------------------------------
# Kernel: one grid step = TB whole images.
# im2col -> MXU matmul(s) -> folded-BN epilogue (+ optional residual, ReLU,
# fused 1x1 shortcut conv).
# ----------------------------------------------------------------------------
def _conv_bn_kernel(*refs, KH, KW, stride, TB, Ho, Wo, relu,
                    has_residual, has_shortcut, per_tap):
    x_ref, w_ref, scale_ref, bias_ref = refs[:4]
    i = 4
    if has_shortcut:
        wsc_ref, ssc_ref, bsc_ref = refs[i:i + 3]
        i += 3
    if has_residual:
        res_ref = refs[i]
        i += 1
    o_ref = refs[i]
    if has_shortcut:
        osc_ref = refs[i + 1]

    Cin = x_ref.shape[-1]
    Cp = o_ref.shape[-1]
    TM = TB * Ho * Wo

    def tap(x, kh, kw):
        t = jax.lax.slice(
            x,
            (0, kh, kw, 0),
            (TB, kh + (Ho - 1) * stride + 1, kw + (Wo - 1) * stride + 1, Cin),
            (1, stride, stride, 1))                  # (TB, Ho, Wo, Cin)
        return t.reshape(TM, Cin)

    centre = None
    if per_tap:
        # Large Cin: K = Cin already fills the MXU -> KH*KW accumulating
        # bf16 matmuls, no lane concat, no f32 round trip of the tile.
        x = x_ref[...]
        acc = jnp.zeros((TM, Cp), jnp.float32)
        for kh in range(KH):
            for kw in range(KW):
                t = tap(x, kh, kw)
                if has_shortcut and kh == KH // 2 and kw == KW // 2:
                    centre = t
                ti = kh * KW + kw
                acc = acc + jnp.dot(t, w_ref[ti * Cin:(ti + 1) * Cin, :],
                                    preferred_element_type=jnp.float32)
    else:
        # Small Cin: deep-K concat keeps the MXU fed (K = KH*KW*Cin).  Taps
        # are built in f32 (most robust lane-concat relayout; tiles are small
        # here) and cast to bf16 only for the MXU operand.
        x = x_ref[...].astype(jnp.float32)
        taps = [tap(x, kh, kw) for kh in range(KH) for kw in range(KW)]
        patches = taps[0] if len(taps) == 1 else jnp.concatenate(taps, axis=-1)
        acc = jnp.dot(patches.astype(w_ref.dtype), w_ref[...],
                      preferred_element_type=jnp.float32)
        if has_shortcut:
            centre = taps[(KH // 2) * KW + (KW // 2)]

    # --- folded BatchNorm (+ residual) (+ ReLU) epilogue, f32 ----------------
    out = acc * scale_ref[...] + bias_ref[...]
    if has_residual:
        out = out + res_ref[...].reshape(TM, Cp).astype(jnp.float32)
    if relu:
        out = jnp.maximum(out, 0.0)
    o_ref[...] = out.reshape(TB, Ho, Wo, Cp).astype(o_ref.dtype)

    if has_shortcut:
        # 1x1 / stride-s / pad-0 shortcut conv == centre tap of the padded KxK
        # window -> x is read from HBM once for both branches.
        sc = jnp.dot(centre.astype(wsc_ref.dtype), wsc_ref[...],
                     preferred_element_type=jnp.float32)
        sc = sc * ssc_ref[...] + bsc_ref[...]
        osc_ref[...] = sc.reshape(TB, Ho, Wo, Cp).astype(osc_ref.dtype)


# ----------------------------------------------------------------------------
# Wrapper: fused Conv2d(bias=False) + folded BN (+residual) (+ReLU)
#          (+ optional fused 1x1 shortcut conv + BN as a second output).
# ----------------------------------------------------------------------------
def conv_bn(x_nhwc, w, scale, bias, *, stride=1, padding=1, relu=False,
            residual=None, shortcut=None, batch_block=None,
            per_tap_min_cin=256, out_dtype=None, compute_dtype=jnp.bfloat16):
    """Returns (N, Ho, Wo, Cp) with Cout zero-padded to Cp = ceil128(Cout);
    if `shortcut=(w_sc, scale_sc, bias_sc)` is given, returns (out, sc_out)."""
    N, H, W, Cx = x_nhwc.shape
    KH, KW, Cin_w, Cout = w.shape
    assert Cin_w <= Cx
    # Extra x channels (lane padding from a previous conv) get zero weights.
    w = _pad_axis(w, 2, Cx)
    Cin = Cx
    Cp = _round_up(Cout, LANES)

    Ho = (H + 2 * padding - KH) // stride + 1
    Wo = (W + 2 * padding - KW) // stride + 1
    out_dtype = x_nhwc.dtype if out_dtype is None else out_dtype

    # ---- operand preparation (bf16 storage, lane-padded Cout) ---------------
    # Single fused cast+pad pass; the old row-window gather is gone.
    xp = jnp.pad(x_nhwc.astype(compute_dtype),
                 ((0, 0), (padding, padding), (padding, padding), (0, 0)))
    Hp, Wp = H + 2 * padding, W + 2 * padding

    w2d = _pad_axis(w, 3, Cp).reshape(KH * KW * Cin, Cp).astype(compute_dtype)
    scale2 = _pad_axis(scale.reshape(1, Cout).astype(jnp.float32), 1, Cp)
    bias2 = _pad_axis(bias.reshape(1, Cout).astype(jnp.float32), 1, Cp)

    per_tap = Cin >= per_tap_min_cin

    # ---- batch tiling: whole images per step, TM = TB*Ho*Wo -----------------
    TB = batch_block if batch_block is not None else _pick_batch_tile(N, Ho * Wo)
    assert N % TB == 0
    # crude VMEM guard: shrink TB if the double-buffered x/out tiles get large
    while TB > 1 and 2 * TB * (Hp * Wp * Cin + 2 * Ho * Wo * Cp) * 2 > 12 * 2**20:
        TB = max(d for d in range(1, TB) if N % d == 0)
    grid = (N // TB,)

    in_specs = [
        pl.BlockSpec((TB, Hp, Wp, Cin), lambda b: (b, 0, 0, 0)),
        pl.BlockSpec((KH * KW * Cin, Cp), lambda b: (0, 0)),
        pl.BlockSpec((1, Cp), lambda b: (0, 0)),
        pl.BlockSpec((1, Cp), lambda b: (0, 0)),
    ]
    args = [xp, w2d, scale2, bias2]

    has_shortcut = shortcut is not None
    if has_shortcut:
        assert KH == KW and padding == KH // 2, "fused shortcut needs 'same' pad"
        w_sc, s_sc, b_sc = shortcut
        assert w_sc.shape[0] == 1 and w_sc.shape[1] == 1
        Cout_sc = w_sc.shape[3]
        assert _round_up(Cout_sc, LANES) == Cp
        wsc2d = _pad_axis(_pad_axis(w_sc, 2, Cin), 3, Cp)
        wsc2d = wsc2d.reshape(Cin, Cp).astype(compute_dtype)
        ssc2 = _pad_axis(s_sc.reshape(1, Cout_sc).astype(jnp.float32), 1, Cp)
        bsc2 = _pad_axis(b_sc.reshape(1, Cout_sc).astype(jnp.float32), 1, Cp)
        in_specs += [
            pl.BlockSpec((Cin, Cp), lambda b: (0, 0)),
            pl.BlockSpec((1, Cp), lambda b: (0, 0)),
            pl.BlockSpec((1, Cp), lambda b: (0, 0)),
        ]
        args += [wsc2d, ssc2, bsc2]

    has_residual = residual is not None
    if has_residual:
        assert residual.shape[:3] == (N, Ho, Wo) and residual.shape[3] <= Cp
        # residual travels in bf16 (half the HBM stream).
        res_p = _pad_axis(residual.astype(compute_dtype), 3, Cp)
        in_specs.append(pl.BlockSpec((TB, Ho, Wo, Cp), lambda b: (b, 0, 0, 0)))
        args.append(res_p)

    out_block = pl.BlockSpec((TB, Ho, Wo, Cp), lambda b: (b, 0, 0, 0))
    tile_struct = jax.ShapeDtypeStruct((N, Ho, Wo, Cp), out_dtype)
    if has_shortcut:
        out_shape = (tile_struct, tile_struct)
        out_specs = (out_block, out_block)
    else:
        out_shape = tile_struct
        out_specs = out_block

    # ---- advisory cost estimate ---------------------------------------------
    flops = 2 * N * Ho * Wo * (KH * KW * Cin) * Cp
    bytes_accessed = (xp.size * 2 + w2d.size * 2
                      + N * Ho * Wo * Cp * 2 * (2 if has_shortcut else 1)
                      + (N * Ho * Wo * Cp * 2 if has_residual else 0))
    if has_shortcut:
        flops += 2 * N * Ho * Wo * Cin * Cp
        bytes_accessed += Cin * Cp * 2
    cost = pl.CostEstimate(flops=int(flops), transcendentals=0,
                           bytes_accessed=int(bytes_accessed))

    # ---- explicit VMEM budget (only raised above the scoped default) --------
    TM = TB * Ho * Wo
    est = (2 * (TB * Hp * Wp * Cin * 2
                + TB * Ho * Wo * Cp * 2 * (2 if has_shortcut else 1)
                + (TB * Ho * Wo * Cp * 2 if has_residual else 0)
                + w2d.size * 2 + (Cin * Cp * 2 if has_shortcut else 0))
           + TM * Cp * 4
           + TM * KH * KW * Cin * (2 if per_tap else 4))
    vmem_limit = None
    if est > 24 * 2**20:
        vmem_limit = min(int(est * 5 // 4), 48 * 2**20)   # v7x has 64 MiB/TC

    kernel = functools.partial(
        _conv_bn_kernel, KH=KH, KW=KW, stride=stride, TB=TB, Ho=Ho, Wo=Wo,
        relu=relu, has_residual=has_residual, has_shortcut=has_shortcut,
        per_tap=per_tap)

    return pl.pallas_call(
        kernel,
        out_shape=out_shape,
        grid=grid,
        in_specs=in_specs,
        out_specs=out_specs,
        compiler_params=pltpu.CompilerParams(
            dimension_semantics=("parallel",),
            vmem_limit_bytes=vmem_limit),
        cost_estimate=cost,
    )(*args)


# ----------------------------------------------------------------------------
# BasicBlock forward
# ----------------------------------------------------------------------------
def fold_bn(gamma, beta, running_mean, running_var, eps=1e-5):
    scale = gamma / jnp.sqrt(running_var + eps)
    return scale, beta - running_mean * scale


def basic_block_nhwc(x_nhwc, params, *, in_planes, planes, stride=1,
                     per_tap_min_cin=256, batch_block=None,
                     out_dtype=jnp.bfloat16):
    """NHWC-in / NHWC-out BasicBlock. Output channels stay zero-padded to a
    multiple of 128 lanes so consecutive blocks chain without transposes or
    slice/re-pad passes (lane-padded channels are provably zero)."""
    assert x_nhwc.shape[-1] >= in_planes
    s1, b1 = fold_bn(*params["bn1"])
    s2, b2 = fold_bn(*params["bn2"])
    downsample = (stride != 1) or (in_planes != planes)

    if downsample:
        ssc, bsc = fold_bn(*params["bn_sc"])
        # conv1+bn1+relu fused with the 1x1 shortcut conv+bn (one x read).
        out1, sc = conv_bn(x_nhwc, params["w1"], s1, b1, stride=stride,
                           padding=1, relu=True,
                           shortcut=(params["w_sc"], ssc, bsc),
                           per_tap_min_cin=per_tap_min_cin,
                           batch_block=batch_block, out_dtype=jnp.bfloat16)
    else:
        out1 = conv_bn(x_nhwc, params["w1"], s1, b1, stride=stride, padding=1,
                       relu=True, per_tap_min_cin=per_tap_min_cin,
                       batch_block=batch_block, out_dtype=jnp.bfloat16)
        sc = x_nhwc.astype(jnp.bfloat16)     # identity residual, bf16 stream

    # conv2 + bn2, residual add, ReLU (epilogue in f32).
    return conv_bn(out1, params["w2"], s2, b2, stride=1, padding=1, relu=True,
                   residual=sc, per_tap_min_cin=per_tap_min_cin,
                   batch_block=batch_block, out_dtype=out_dtype)


def basic_block_forward(x_nchw, params, *, in_planes, planes, stride=1,
                        per_tap_min_cin=256, batch_block=None):
    """NCHW in / NCHW out, matching the PyTorch module API."""
    x = jnp.transpose(x_nchw, (0, 2, 3, 1))            # NCHW -> NHWC
    out = basic_block_nhwc(x, params, in_planes=in_planes, planes=planes,
                           stride=stride, per_tap_min_cin=per_tap_min_cin,
                           batch_block=batch_block, out_dtype=x_nchw.dtype)
    out = out[..., :planes]                            # drop lane padding
    return jnp.transpose(out, (0, 3, 1, 2))            # back to NCHW


# ----------------------------------------------------------------------------
# Pure-JAX reference (mirrors the kernel's bf16 cast points)
# ----------------------------------------------------------------------------
def _ref_conv(x, w, stride, padding):
    return jax.lax.conv_general_dilated(
        x.astype(jnp.bfloat16), w.astype(jnp.bfloat16),
        window_strides=(stride, stride),
        padding=((padding, padding), (padding, padding)),
        dimension_numbers=("NHWC", "HWIO", "NHWC"),
        preferred_element_type=jnp.float32)


def basic_block_ref(x_nchw, params, *, in_planes, planes, stride=1):
    x = jnp.transpose(x_nchw, (0, 2, 3, 1))
    s1, b1 = fold_bn(*params["bn1"])
    s2, b2 = fold_bn(*params["bn2"])
    h1 = jnp.maximum(_ref_conv(x, params["w1"], stride, 1) * s1 + b1, 0.0)
    h1 = h1.astype(jnp.bfloat16)                        # kernel intermediate dtype
    if stride != 1 or in_planes != planes:
        ssc, bsc = fold_bn(*params["bn_sc"])
        sc = _ref_conv(x, params["w_sc"], stride, 0) * ssc + bsc
        sc = sc.astype(jnp.bfloat16).astype(jnp.float32)
    else:
        sc = x.astype(jnp.bfloat16).astype(jnp.float32)  # residual is bf16 now
    out = _ref_conv(h1, params["w2"], 1, 1) * s2 + b2 + sc
    out = jnp.maximum(out, 0.0).astype(x_nchw.dtype)
    return jnp.transpose(out, (0, 3, 1, 2))


# ----------------------------------------------------------------------------
if __name__ == "__main__":
    key = jax.random.PRNGKey(0)
    N, in_planes, planes, H, W = 2, 4, 8, 16, 16
    stride = 1  # in_planes != planes -> downsample shortcut (1x1 conv + BN)

    ks = jax.random.split(key, 16)
    params = {
        # conv weights stored HWIO (KH, KW, Cin, Cout)
        "w1": 0.1 * jax.random.normal(ks[0], (3, 3, in_planes, planes), jnp.float32),
        "w2": 0.1 * jax.random.normal(ks[1], (3, 3, planes, planes), jnp.float32),
        "w_sc": 0.1 * jax.random.normal(ks[2], (1, 1, in_planes, planes), jnp.float32),
        # BN params: (gamma, beta, running_mean, running_var)
        "bn1": (1.0 + 0.1 * jax.random.normal(ks[3], (planes,), jnp.float32),
                0.1 * jax.random.normal(ks[4], (planes,), jnp.float32),
                0.05 * jax.random.normal(ks[5], (planes,), jnp.float32),
                1.0 + 0.1 * jax.random.uniform(ks[6], (planes,), jnp.float32)),
        "bn2": (1.0 + 0.1 * jax.random.normal(ks[7], (planes,), jnp.float32),
                0.1 * jax.random.normal(ks[8], (planes,), jnp.float32),
                0.05 * jax.random.normal(ks[9], (planes,), jnp.float32),
                1.0 + 0.1 * jax.random.uniform(ks[10], (planes,), jnp.float32)),
        "bn_sc": (jnp.ones((planes,), jnp.float32),
                  jnp.zeros((planes,), jnp.float32),
                  jnp.zeros((planes,), jnp.float32),
                  jnp.ones((planes,), jnp.float32)),
    }
    x = jax.random.normal(ks[11], (N, in_planes, H, W), jnp.float32)  # NCHW

    # --- test 1: NCHW module API, downsample shortcut, deep-K concat path ----
    out = basic_block_forward(x, params, in_planes=in_planes, planes=planes,
                              stride=stride)
    out = jax.block_until_ready(out)
    ref = jax.block_until_ready(
        basic_block_ref(x, params, in_planes=in_planes, planes=planes,
                        stride=stride))
    assert out.shape == (N, planes, H // stride, W // stride)
    np.testing.assert_allclose(np.asarray(out, np.float32),
                               np.asarray(ref, np.float32),
                               rtol=1e-2, atol=1e-2)

    # --- test 2: NHWC-persistent chain of two blocks, per-tap matmul path ----
    params2 = {
        "w1": 0.1 * jax.random.normal(ks[12], (3, 3, planes, planes), jnp.float32),
        "w2": 0.1 * jax.random.normal(ks[13], (3, 3, planes, planes), jnp.float32),
        "bn1": (1.0 + 0.1 * jax.random.normal(ks[14], (planes,), jnp.float32),
                0.1 * jax.random.normal(ks[15], (planes,), jnp.float32),
                jnp.zeros((planes,), jnp.float32),
                jnp.ones((planes,), jnp.float32)),
        "bn2": (jnp.ones((planes,), jnp.float32),
                jnp.zeros((planes,), jnp.float32),
                jnp.zeros((planes,), jnp.float32),
                jnp.ones((planes,), jnp.float32)),
    }
    x_nhwc = jnp.transpose(x, (0, 2, 3, 1))
    # per_tap_min_cin lowered to exercise the per-tap accumulating-matmul path
    # (incl. the fused shortcut) on these small test channel counts.
    h1 = basic_block_nhwc(x_nhwc, params, in_planes=in_planes, planes=planes,
                          stride=stride, per_tap_min_cin=4)
    h2 = basic_block_nhwc(h1, params2, in_planes=planes, planes=planes,
                          stride=1, per_tap_min_cin=4)
    h2 = jax.block_until_ready(h2)
    ref2 = jax.block_until_ready(
        basic_block_ref(ref, params2, in_planes=planes, planes=planes, stride=1))
    out2 = jnp.transpose(h2[..., :planes], (0, 3, 1, 2))
    assert out2.shape == (N, planes, H, W)
    np.testing.assert_allclose(np.asarray(out2, np.float32),
                               np.asarray(ref2, np.float32),
                               rtol=2e-2, atol=2e-2)

    print("KERNEL_OK")
</pallas_src>

<mosaic_0001>
module attributes {stable_mosaic.version = 11 : i64} {
  func.func @_conv_bn_kernel(%arg0: i32, %arg1: memref<1x18x18x4xbf16, #tpu.memory_space<vmem>>, %arg2: memref<36x128xbf16, #tpu.memory_space<vmem>>, %arg3: memref<1x128xf32, #tpu.memory_space<vmem>>, %arg4: memref<1x128xf32, #tpu.memory_space<vmem>>, %arg5: memref<4x128xbf16, #tpu.memory_space<vmem>>, %arg6: memref<1x128xf32, #tpu.memory_space<vmem>>, %arg7: memref<1x128xf32, #tpu.memory_space<vmem>>, %arg8: memref<1x16x16x128xbf16, #tpu.memory_space<vmem>>, %arg9: memref<1x16x16x128xbf16, #tpu.memory_space<vmem>>) attributes {dimension_semantics = [#tpu.dimension_semantics<parallel>], iteration_bounds = array<i64: 2>, scalar_prefetch = 0 : i64, scratch_operands = 0 : i64, tpu.core_type = #tpu.core_type<tc>, window_params = [{transform_indices = @transform_0, window_bounds = array<i64: 1, 18, 18, 4>}, {pipeline_mode = #tpu.pipeline_mode<synchronous>, transform_indices = @transform_1, window_bounds = array<i64: 36, 128>}, {pipeline_mode = #tpu.pipeline_mode<synchronous>, transform_indices = @transform_2, window_bounds = array<i64: 1, 128>}, {pipeline_mode = #tpu.pipeline_mode<synchronous>, transform_indices = @transform_3, window_bounds = array<i64: 1, 128>}, {pipeline_mode = #tpu.pipeline_mode<synchronous>, transform_indices = @transform_4, window_bounds = array<i64: 4, 128>}, {pipeline_mode = #tpu.pipeline_mode<synchronous>, transform_indices = @transform_5, window_bounds = array<i64: 1, 128>}, {pipeline_mode = #tpu.pipeline_mode<synchronous>, transform_indices = @transform_6, window_bounds = array<i64: 1, 128>}, {transform_indices = @transform_7, window_bounds = array<i64: 1, 16, 16, 128>}, {transform_indices = @transform_8, window_bounds = array<i64: 1, 16, 16, 128>}]} {
    %c0 = arith.constant 0 : index
    %c0_0 = arith.constant 0 : index
    %c0_1 = arith.constant 0 : index
    %c0_2 = arith.constant 0 : index
    %0 = vector.load %arg1[%c0, %c0_0, %c0_1, %c0_2] : memref<1x18x18x4xbf16, #tpu.memory_space<vmem>>, vector<1x18x18x4xbf16>
    %1 = arith.extf %0 : vector<1x18x18x4xbf16> to vector<1x18x18x4xf32>
    %2 = vector.extract_strided_slice %1 {offsets = [0, 0, 0, 0], sizes = [1, 16, 16, 4], strides = [1, 1, 1, 1]} : vector<1x18x18x4xf32> to vector<1x16x16x4xf32>
    %3 = vector.shape_cast %2 : vector<1x16x16x4xf32> to vector<256x4xf32>
    %4 = vector.extract_strided_slice %1 {offsets = [0, 0, 1, 0], sizes = [1, 16, 16, 4], strides = [1, 1, 1, 1]} : vector<1x18x18x4xf32> to vector<1x16x16x4xf32>
    %5 = vector.shape_cast %4 : vector<1x16x16x4xf32> to vector<256x4xf32>
    %6 = vector.extract_strided_slice %1 {offsets = [0, 0, 2, 0], sizes = [1, 16, 16, 4], strides = [1, 1, 1, 1]} : vector<1x18x18x4xf32> to vector<1x16x16x4xf32>
    %7 = vector.shape_cast %6 : vector<1x16x16x4xf32> to vector<256x4xf32>
    %8 = vector.extract_strided_slice %1 {offsets = [0, 1, 0, 0], sizes = [1, 16, 16, 4], strides = [1, 1, 1, 1]} : vector<1x18x18x4xf32> to vector<1x16x16x4xf32>
    %9 = vector.shape_cast %8 : vector<1x16x16x4xf32> to vector<256x4xf32>
    %10 = vector.extract_strided_slice %1 {offsets = [0, 1, 1, 0], sizes = [1, 16, 16, 4], strides = [1, 1, 1, 1]} : vector<1x18x18x4xf32> to vector<1x16x16x4xf32>
    %11 = vector.shape_cast %10 : vector<1x16x16x4xf32> to vector<256x4xf32>
    %12 = vector.extract_strided_slice %1 {offsets = [0, 1, 2, 0], sizes = [1, 16, 16, 4], strides = [1, 1, 1, 1]} : vector<1x18x18x4xf32> to vector<1x16x16x4xf32>
    %13 = vector.shape_cast %12 : vector<1x16x16x4xf32> to vector<256x4xf32>
    %14 = vector.extract_strided_slice %1 {offsets = [0, 2, 0, 0], sizes = [1, 16, 16, 4], strides = [1, 1, 1, 1]} : vector<1x18x18x4xf32> to vector<1x16x16x4xf32>
    %15 = vector.shape_cast %14 : vector<1x16x16x4xf32> to vector<256x4xf32>
    %16 = vector.extract_strided_slice %1 {offsets = [0, 2, 1, 0], sizes = [1, 16, 16, 4], strides = [1, 1, 1, 1]} : vector<1x18x18x4xf32> to vector<1x16x16x4xf32>
    %17 = vector.shape_cast %16 : vector<1x16x16x4xf32> to vector<256x4xf32>
    %18 = vector.extract_strided_slice %1 {offsets = [0, 2, 2, 0], sizes = [1, 16, 16, 4], strides = [1, 1, 1, 1]} : vector<1x18x18x4xf32> to vector<1x16x16x4xf32>
    %19 = vector.shape_cast %18 : vector<1x16x16x4xf32> to vector<256x4xf32>
    %20 = tpu.concatenate %3, %5, %7, %9, %11, %13, %15, %17, %19 in 1 : vector<256x4xf32>, vector<256x4xf32>, vector<256x4xf32>, vector<256x4xf32>, vector<256x4xf32>, vector<256x4xf32>, vector<256x4xf32>, vector<256x4xf32>, vector<256x4xf32> -> vector<256x36xf32>
    %21 = arith.truncf %20 : vector<256x36xf32> to vector<256x36xbf16>
    %c0_3 = arith.constant 0 : index
    %c0_4 = arith.constant 0 : index
    %22 = vector.load %arg2[%c0_3, %c0_4] : memref<36x128xbf16, #tpu.memory_space<vmem>>, vector<36x128xbf16>
    %cst = arith.constant dense<0.000000e+00> : vector<256x128xf32>
    %23 = tpu.matmul %21, %22, %cst {dimension_numbers = #tpu.dot_dimension_numbers<[1], [0], [0], [1], [0, 0, 1, 1], [], []>} : vector<256x36xbf16>, vector<36x128xbf16>, vector<256x128xf32> -> vector<256x128xf32>
    %c0_5 = arith.constant 0 : index
    %c0_6 = arith.constant 0 : index
    %24 = vector.load %arg3[%c0_5, %c0_6] : memref<1x128xf32, #tpu.memory_space<vmem>>, vector<1x128xf32>
    %25 = vector.broadcast %24 : vector<1x128xf32> to vector<256x128xf32>
    %26 = arith.mulf %23, %25 : vector<256x128xf32>
    %c0_7 = arith.constant 0 : index
    %c0_8 = arith.constant 0 : index
    %27 = vector.load %arg4[%c0_7, %c0_8] : memref<1x128xf32, #tpu.memory_space<vmem>>, vector<1x128xf32>
    %28 = vector.broadcast %27 : vector<1x128xf32> to vector<256x128xf32>
    %29 = arith.addf %26, %28 : vector<256x128xf32>
    %cst_9 = arith.constant 0.000000e+00 : f32
    %30 = vector.broadcast %cst_9 : f32 to vector<256x128xf32>
    %31 = arith.maximumf %29, %30 : vector<256x128xf32>
    %32 = vector.shape_cast %31 : vector<256x128xf32> to vector<1x16x16x128xf32>
    %33 = arith.truncf %32 : vector<1x16x16x128xf32> to vector<1x16x16x128xbf16>
    %c0_10 = arith.constant 0 : index
    %c0_11 = arith.constant 0 : index
    %c0_12 = arith.constant 0 : index
    %c0_13 = arith.constant 0 : index
    %34 = vector.load %arg8[%c0_10, %c0_11, %c0_12, %c0_13] : memref<1x16x16x128xbf16, #tpu.memory_space<vmem>>, vector<1x16x16x128xbf16>
    tpu.vector_store %arg8[%c0_10, %c0_11, %c0_12, %c0_13], %33 {strides = array<i32>} : memref<1x16x16x128xbf16, #tpu.memory_space<vmem>>, vector<1x16x16x128xbf16>,
    %35 = arith.truncf %11 : vector<256x4xf32> to vector<256x4xbf16>
    %c0_14 = arith.constant 0 : index
    %c0_15 = arith.constant 0 : index
    %36 = vector.load %arg5[%c0_14, %c0_15] : memref<4x128xbf16, #tpu.memory_space<vmem>>, vector<4x128xbf16>
    %cst_16 = arith.constant dense<0.000000e+00> : vector<256x128xf32>
    %37 = tpu.matmul %35, %36, %cst_16 {dimension_numbers = #tpu.dot_dimension_numbers<[1], [0], [0], [1], [0, 0, 1, 1], [], []>} : vector<256x4xbf16>, vector<4x128xbf16>, vector<256x128xf32> -> vector<256x128xf32>
    %c0_17 = arith.constant 0 : index
    %c0_18 = arith.constant 0 : index
    %38 = vector.load %arg6[%c0_17, %c0_18] : memref<1x128xf32, #tpu.memory_space<vmem>>, vector<1x128xf32>
    %39 = vector.broadcast %38 : vector<1x128xf32> to vector<256x128xf32>
    %40 = arith.mulf %37, %39 : vector<256x128xf32>
    %c0_19 = arith.constant 0 : index
    %c0_20 = arith.constant 0 : index
    %41 = vector.load %arg7[%c0_19, %c0_20] : memref<1x128xf32, #tpu.memory_space<vmem>>, vector<1x128xf32>
    %42 = vector.broadcast %41 : vector<1x128xf32> to vector<256x128xf32>
    %43 = arith.addf %40, %42 : vector<256x128xf32>
    %44 = vector.shape_cast %43 : vector<256x128xf32> to vector<1x16x16x128xf32>
    %45 = arith.truncf %44 : vector<1x16x16x128xf32> to vector<1x16x16x128xbf16>
    %c0_21 = arith.constant 0 : index
    %c0_22 = arith.constant 0 : index
    %c0_23 = arith.constant 0 : index
    %c0_24 = arith.constant 0 : index
    %46 = vector.load %arg9[%c0_21, %c0_22, %c0_23, %c0_24] : memref<1x16x16x128xbf16, #tpu.memory_space<vmem>>, vector<1x16x16x128xbf16>
    tpu.vector_store %arg9[%c0_21, %c0_22, %c0_23, %c0_24], %45 {strides = array<i32>} : memref<1x16x16x128xbf16, #tpu.memory_space<vmem>>, vector<1x16x16x128xbf16>,
    return
  }
  func.func @transform_0(%arg0: i32) -> (i32, i32, i32, i32) {
    %c0_i32 = arith.constant 0 : i32
    %c0_i32_0 = arith.constant 0 : i32
    %c0_i32_1 = arith.constant 0 : i32
    %c0_i32_2 = arith.constant 0 : i32
    return %arg0, %c0_i32, %c0_i32_0, %c0_i32_1 : i32, i32, i32, i32
  }
  func.func @transform_1(%arg0: i32) -> (i32, i32) {
    %c0_i32 = arith.constant 0 : i32
    %c0_i32_0 = arith.constant 0 : i32
    %c0_i32_1 = arith.constant 0 : i32
    return %c0_i32, %c0_i32_0 : i32, i32
  }
  func.func @transform_2(%arg0: i32) -> (i32, i32) {
    %c0_i32 = arith.constant 0 : i32
    %c0_i32_0 = arith.constant 0 : i32
    %c0_i32_1 = arith.constant 0 : i32
    return %c0_i32, %c0_i32_0 : i32, i32
  }
  func.func @transform_3(%arg0: i32) -> (i32, i32) {
    %c0_i32 = arith.constant 0 : i32
    %c0_i32_0 = arith.constant 0 : i32
    %c0_i32_1 = arith.constant 0 : i32
    return %c0_i32, %c0_i32_0 : i32, i32
  }
  func.func @transform_4(%arg0: i32) -> (i32, i32) {
    %c0_i32 = arith.constant 0 : i32
    %c0_i32_0 = arith.constant 0 : i32
    %c0_i32_1 = arith.constant 0 : i32
    return %c0_i32, %c0_i32_0 : i32, i32
  }
  func.func @transform_5(%arg0: i32) -> (i32, i32) {
    %c0_i32 = arith.constant 0 : i32
    %c0_i32_0 = arith.constant 0 : i32
    %c0_i32_1 = arith.constant 0 : i32
    return %c0_i32, %c0_i32_0 : i32, i32
  }
  func.func @transform_6(%arg0: i32) -> (i32, i32) {
    %c0_i32 = arith.constant 0 : i32
    %c0_i32_0 = arith.constant 0 : i32
    %c0_i32_1 = arith.constant 0 : i32
    return %c0_i32, %c0_i32_0 : i32, i32
  }
  func.func @transform_7(%arg0: i32) -> (i32, i32, i32, i32) {
    %c0_i32 = arith.constant 0 : i32
    %c0_i32_0 = arith.constant 0 : i32
    %c0_i32_1 = arith.constant 0 : i32
    %c0_i32_2 = arith.constant 0 : i32
    return %arg0, %c0_i32, %c0_i32_0, %c0_i32_1 : i32, i32, i32, i32
  }
  func.func @transform_8(%arg0: i32) -> (i32, i32, i32, i32) {
    %c0_i32 = arith.constant 0 : i32
    %c0_i32_0 = arith.constant 0 : i32
    %c0_i32_1 = arith.constant 0 : i32
    %c0_i32_2 = arith.constant 0 : i32
    return %arg0, %c0_i32, %c0_i32_0, %c0_i32_1 : i32, i32, i32, i32
  }
}

</mosaic_0001>

<llo_original>
// kernel: tpu_custom_call.1
$region0: #{tpu_custom_call.1}
  #allocation0 [shape = 'u32[]', space=smem, size = 0x4, offset = 0x4, fixed_abs, tag = 'smem constant byte address 0x4 - core index']
  #allocation1 [shape = 'u32[144,128]{1,0:T(1,128)}', space=vmem, size = 0x12000, scoped, tag = 'internal scratch']
  %s0 = inlined_call_operand.vmem [shape: bf16[2,18,18,4], index: 0, kind: input, shape index: {}]
  %s1 = inlined_call_operand.vmem [shape: bf16[36,128], index: 1, kind: input, shape index: {}]
  %s2 = inlined_call_operand.vmem [shape: f32[1,128], index: 2, kind: input, shape index: {}]
  %s3 = inlined_call_operand.vmem [shape: f32[1,128], index: 3, kind: input, shape index: {}]
  %s4 = inlined_call_operand.vmem [shape: bf16[4,128], index: 4, kind: input, shape index: {}]
  %s5 = inlined_call_operand.vmem [shape: f32[1,128], index: 5, kind: input, shape index: {}]
  %s6 = inlined_call_operand.vmem [shape: f32[1,128], index: 6, kind: input, shape index: {}]
  %s7 = inlined_call_operand.hbm [shape: bf16[2,16,16,128], index: 7, kind: output, shape index: {0}]
  %s8 = inlined_call_operand.hbm [shape: bf16[2,16,16,128], index: 8, kind: output, shape index: {1}]
  %9 = xla_tuple %s7, %s8
  %s10 = sld [smem:[#allocation0]]
  $region69: #{tpu_custom_call.1} parent=0
    _
  %s12 = ssub.s32 1, %s10
  %s13 = scalar_select 0, %s12, %s10
  $region1: #{tpu_custom_call.1} parent=0
    #allocation2 [shape = 'u8[131072]{0}', space=vmem, size = 0x20000, scoped, tag = 'output window, operand 0']
    #allocation3 [shape = 's32[2]{0}', space=sflag, size = 0x8, scoped, tag = 'scoped memory for tpu_custom_call.1']
    #allocation4 [shape = 'u8[131072]{0}', space=vmem, size = 0x20000, scoped, tag = 'output window, operand 1']
    #allocation5 [shape = 's32[2]{0}', space=sflag, size = 0x8, scoped, tag = 'scoped memory for tpu_custom_call.1']
    %14 = vsyncpa [#allocation3], 0
    %s15 = scalar_lea.sflag [#allocation3], 1
    %16 = vsyncpa %s15, 0
    %17 = vsyncpa [#allocation5], 0
    %s18 = scalar_lea.sflag [#allocation5], 1
    %19 = vsyncpa %s18, 0
    loop: start=0, step=1, limit=4
    $region2: #{tpu_custom_call.1} parent=1 // loop_pre_header
      _
    $region3: #{tpu_custom_call.1} parent=1 // loop_header
      %s21 = sphi 0, %s25
      %p22 = scmp.ge.s32.totalorder %s21, 4
      %s31 = sphi 0, %s33
      %s34 = sphi 0, %s31
      %s35 = sphi 0, %s34
      %s51 = sphi 0, %s35
      %s55 = sphi 0, %s55
      %s57 = sphi 0, %s55
      %s58 = sphi 0, %s57
      %s72 = sphi 0, %s58
      %s76 = sphi 0, %s76
      %s78 = sphi 0, %s76
      %s79 = sphi 0, %s78
      %s93 = sphi 0, %s79
      %s97 = sphi 0, %s97
      %s99 = sphi 0, %s97
      %s100 = sphi 0, %s99
      %s114 = sphi 0, %s100
      %s118 = sphi 0, %s118
      %s120 = sphi 0, %s118
      %s121 = sphi 0, %s120
      %s135 = sphi 0, %s121
      %s139 = sphi 0, %s139
      %s141 = sphi 0, %s139
      %s142 = sphi 0, %s141
      %s156 = sphi 0, %s142
      %s160 = sphi 0, %s160
      %s162 = sphi 0, %s160
      %s163 = sphi 0, %s162
      %s177 = sphi 0, %s163
      %s183 = sphi 0, %s185
      %s186 = sphi 0, %s183
      %s187 = sphi 0, %s186
      %s203 = sphi 0, %s187
      %s209 = sphi 0, %s211
      %s212 = sphi 0, %s209
      %s213 = sphi 0, %s212
      %s229 = sphi 0, %s213
    $region4: #{tpu_custom_call.1} parent=1 // loop_header_branch
      %24 = sbr.rel (%p22) target = $region8
    $region5: #{tpu_custom_call.1} parent=1 // loop_body
      %s26 = ssub.s32 %s21, 1
      %s27 = ssub.s32 %s21, 2
      %s28 = sadd.s32 %s21, 1
      %s29 = ssub.s32 %s21, %s28
      %p30 = scmp.eq.s32.totalorder %s29, 0
      %s32 = sadd.s32 %s31, 1
      %s33 = scalar_select %p30, %s31, %s32
      %p36 = pneg %p30
      %p37 = scmp.eq.s32.totalorder %s21, 1
      %p38 = por %p36, %p37
      %p39 = scmp.ne.s32.totalorder %s31, %s34
      %p40 = scmp.eq.s32.totalorder %s21, 0
      %p41 = por %p39, %p40
      %p42 = scmp.ne.s32.totalorder %s31, %s34
      %p43 = scmp.eq.s32.totalorder %s26, 1
      %p44 = por %p42, %p43
      %p45 = scmp.ne.s32.totalorder %s34, %s35
      %p46 = scmp.eq.s32.totalorder %s26, 0
      %p47 = por %p45, %p46
      %p48 = scmp.ne.s32.totalorder %s34, %s35
      %p49 = scmp.eq.s32.totalorder %s27, 1
      %p50 = por %p48, %p49
      %p52 = scmp.ne.s32.totalorder %s35, %s51
      %p53 = scmp.eq.s32.totalorder %s27, 0
      %p54 = por %p52, %p53
      %s56 = sadd.s32 %s55, 1
      %p59 = scmp.eq.s32.totalorder %s21, 1
      %p60 = scmp.ne.s32.totalorder %s55, %s57
      %p61 = scmp.eq.s32.totalorder %s21, 0
      %p62 = por %p60, %p61
      %p63 = scmp.ne.s32.totalorder %s55, %s57
      %p64 = scmp.eq.s32.totalorder %s26, 1
      %p65 = por %p63, %p64
      %p66 = scmp.ne.s32.totalorder %s57, %s58
      %p67 = scmp.eq.s32.totalorder %s26, 0
      %p68 = por %p66, %p67
      %p69 = scmp.ne.s32.totalorder %s57, %s58
      %p70 = scmp.eq.s32.totalorder %s27, 1
      %p71 = por %p69, %p70
      %p73 = scmp.ne.s32.totalorder %s58, %s72
      %p74 = scmp.eq.s32.totalorder %s27, 0
      %p75 = por %p73, %p74
      %s77 = sadd.s32 %s76, 1
      %p80 = scmp.eq.s32.totalorder %s21, 1
      %p81 = scmp.ne.s32.totalorder %s76, %s78
      %p82 = scmp.eq.s32.totalorder %s21, 0
      %p83 = por %p81, %p82
      %p84 = scmp.ne.s32.totalorder %s76, %s78
      %p85 = scmp.eq.s32.totalorder %s26, 1
      %p86 = por %p84, %p85
      %p87 = scmp.ne.s32.totalorder %s78, %s79
      %p88 = scmp.eq.s32.totalorder %s26, 0
      %p89 = por %p87, %p88
      %p90 = scmp.ne.s32.totalorder %s78, %s79
      %p91 = scmp.eq.s32.totalorder %s27, 1
      %p92 = por %p90, %p91
      %p94 = scmp.ne.s32.totalorder %s79, %s93
      %p95 = scmp.eq.s32.totalorder %s27, 0
      %p96 = por %p94, %p95
      %s98 = sadd.s32 %s97, 1
      %p101 = scmp.eq.s32.totalorder %s21, 1
      %p102 = scmp.ne.s32.totalorder %s97, %s99
      %p103 = scmp.eq.s32.totalorder %s21, 0
      %p104 = por %p102, %p103
      %p105 = scmp.ne.s32.totalorder %s97, %s99
      %p106 = scmp.eq.s32.totalorder %s26, 1
      %p107 = por %p105, %p106
      %p108 = scmp.ne.s32.totalorder %s99, %s100
      %p109 = scmp.eq.s32.totalorder %s26, 0
      %p110 = por %p108, %p109
      %p111 = scmp.ne.s32.totalorder %s99, %s100
      %p112 = scmp.eq.s32.totalorder %s27, 1
      %p113 = por %p111, %p112
      %p115 = scmp.ne.s32.totalorder %s100, %s114
      %p116 = scmp.eq.s32.totalorder %s27, 0
      %p117 = por %p115, %p116
      %s119 = sadd.s32 %s118, 1
      %p122 = scmp.eq.s32.totalorder %s21, 1
      %p123 = scmp.ne.s32.totalorder %s118, %s120
      %p124 = scmp.eq.s32.totalorder %s21, 0
      %p125 = por %p123, %p124
      %p126 = scmp.ne.s32.totalorder %s118, %s120
      %p127 = scmp.eq.s32.totalorder %s26, 1
      %p128 = por %p126, %p127
      %p129 = scmp.ne.s32.totalorder %s120, %s121
      %p130 = scmp.eq.s32.totalorder %s26, 0
      %p131 = por %p129, %p130
      %p132 = scmp.ne.s32.totalorder %s120, %s121
      %p133 = scmp.eq.s32.totalorder %s27, 1
      %p134 = por %p132, %p133
      %p136 = scmp.ne.s32.totalorder %s121, %s135
      %p137 = scmp.eq.s32.totalorder %s27, 0
      %p138 = por %p136, %p137
      %s140 = sadd.s32 %s139, 1
      %p143 = scmp.eq.s32.totalorder %s21, 1
      %p144 = scmp.ne.s32.totalorder %s139, %s141
      %p145 = scmp.eq.s32.totalorder %s21, 0
      %p146 = por %p144, %p145
      %p147 = scmp.ne.s32.totalorder %s139, %s141
      %p148 = scmp.eq.s32.totalorder %s26, 1
      %p149 = por %p147, %p148
      %p150 = scmp.ne.s32.totalorder %s141, %s142
      %p151 = scmp.eq.s32.totalorder %s26, 0
      %p152 = por %p150, %p151
      %p153 = scmp.ne.s32.totalorder %s141, %s142
      %p154 = scmp.eq.s32.totalorder %s27, 1
      %p155 = por %p153, %p154
      %p157 = scmp.ne.s32.totalorder %s142, %s156
      %p158 = scmp.eq.s32.totalorder %s27, 0
      %p159 = por %p157, %p158
      %s161 = sadd.s32 %s160, 1
      %p164 = scmp.eq.s32.totalorder %s21, 1
      %p165 = scmp.ne.s32.totalorder %s160, %s162
      %p166 = scmp.eq.s32.totalorder %s21, 0
      %p167 = por %p165, %p166
      %p168 = scmp.ne.s32.totalorder %s160, %s162
      %p169 = scmp.eq.s32.totalorder %s26, 1
      %p170 = por %p168, %p169
      %p171 = scmp.ne.s32.totalorder %s162, %s163
      %p172 = scmp.eq.s32.totalorder %s26, 0
      %p173 = por %p171, %p172
      %p174 = scmp.ne.s32.totalorder %s162, %s163
      %p175 = scmp.eq.s32.totalorder %s27, 1
      %p176 = por %p174, %p175
      %p178 = scmp.ne.s32.totalorder %s163, %s177
      %p179 = scmp.eq.s32.totalorder %s27, 0
      %p180 = por %p178, %p179
      %s181 = ssub.s32 %s21, %s28
      %p182 = scmp.eq.s32.totalorder %s181, 0
      %s184 = sadd.s32 %s183, 1
      %s185 = scalar_select %p182, %s183, %s184
      %p188 = pneg %p182
      %p189 = scmp.eq.s32.totalorder %s21, 1
      %p190 = por %p188, %p189
      %p191 = scmp.ne.s32.totalorder %s183, %s186
      %p192 = scmp.eq.s32.totalorder %s21, 0
      %p193 = por %p191, %p192
      %p194 = scmp.ne.s32.totalorder %s183, %s186
      %p195 = scmp.eq.s32.totalorder %s26, 1
      %p196 = por %p194, %p195
      %p197 = scmp.ne.s32.totalorder %s186, %s187
      %p198 = scmp.eq.s32.totalorder %s26, 0
      %p199 = por %p197, %p198
      %p200 = scmp.ne.s32.totalorder %s186, %s187
      %p201 = scmp.eq.s32.totalorder %s27, 1
      %p202 = por %p200, %p201
      %p204 = scmp.ne.s32.totalorder %s187, %s203
      %p205 = scmp.eq.s32.totalorder %s27, 0
      %p206 = por %p204, %p205
      %s207 = ssub.s32 %s21, %s28
      %p208 = scmp.eq.s32.totalorder %s207, 0
      %s210 = sadd.s32 %s209, 1
      %s211 = scalar_select %p208, %s209, %s210
      %p214 = pneg %p208
      %p215 = scmp.eq.s32.totalorder %s21, 1
      %p216 = por %p214, %p215
      %p217 = scmp.ne.s32.totalorder %s209, %s212
      %p218 = scmp.eq.s32.totalorder %s21, 0
      %p219 = por %p217, %p218
      %p220 = scmp.ne.s32.totalorder %s209, %s212
      %p221 = scmp.eq.s32.totalorder %s26, 1
      %p222 = por %p220, %p221
      %p223 = scmp.ne.s32.totalorder %s212, %s213
      %p224 = scmp.eq.s32.totalorder %s26, 0
      %p225 = por %p223, %p224
      %p226 = scmp.ne.s32.totalorder %s212, %s213
      %p227 = scmp.eq.s32.totalorder %s27, 1
      %p228 = por %p226, %p227
      %p230 = scmp.ne.s32.totalorder %s213, %s229
      %p231 = scmp.eq.s32.totalorder %s27, 0
      %p232 = por %p230, %p231
      %p233 = scmp.le.s32.totalorder 1, %s21
      %p234 = scmp.lt.s32.totalorder %s21, 3
      %p235 = pnand %p233, %p234
      %p236 = pneg %p235
      // Predicated region
      $region9: #{tpu_custom_call.1} parent=5 // pred_check
        _
      $region10: #{tpu_custom_call.1} parent=5 // pred_check_branch
        %238 = sbr.rel (%p235) target = $region12
      $region11: #{tpu_custom_call.1} parent=5 // pred_region
        %s239 = ssub.s32 %s21, 1
        // Predicated region
        $region13: #{tpu_custom_call.1} parent=11 // pred_check
          %p240 = pneg %p68
        $region14: #{tpu_custom_call.1} parent=11 // pred_check_branch
          %242 = sbr.rel (%p240) target = $region16
        $region15: #{tpu_custom_call.1} parent=11 // pred_region
          _
        $region16: #{tpu_custom_call.1} parent=11 // pred_fallthru
          _
        // Predicated region
        $region17: #{tpu_custom_call.1} parent=11 // pred_check
          %p243 = pneg %p89
        $region18: #{tpu_custom_call.1} parent=11 // pred_check_branch
          %245 = sbr.rel (%p243) target = $region20
        $region19: #{tpu_custom_call.1} parent=11 // pred_region
          _
        $region20: #{tpu_custom_call.1} parent=11 // pred_fallthru
          _
        // Predicated region
        $region21: #{tpu_custom_call.1} parent=11 // pred_check
          %p246 = pneg %p110
        $region22: #{tpu_custom_call.1} parent=11 // pred_check_branch
          %248 = sbr.rel (%p246) target = $region24
        $region23: #{tpu_custom_call.1} parent=11 // pred_region
          _
        $region24: #{tpu_custom_call.1} parent=11 // pred_fallthru
          _
        // Predicated region
        $region25: #{tpu_custom_call.1} parent=11 // pred_check
          %p249 = pneg %p131
        $region26: #{tpu_custom_call.1} parent=11 // pred_check_branch
          %251 = sbr.rel (%p249) target = $region28
        $region27: #{tpu_custom_call.1} parent=11 // pred_region
          _
        $region28: #{tpu_custom_call.1} parent=11 // pred_fallthru
          _
        // Predicated region
        $region29: #{tpu_custom_call.1} parent=11 // pred_check
          %p252 = pneg %p152
        $region30: #{tpu_custom_call.1} parent=11 // pred_check_branch
          %254 = sbr.rel (%p252) target = $region32
        $region31: #{tpu_custom_call.1} parent=11 // pred_region
          _
        $region32: #{tpu_custom_call.1} parent=11 // pred_fallthru
          _
        // Predicated region
        $region33: #{tpu_custom_call.1} parent=11 // pred_check
          %p255 = pneg %p173
        $region34: #{tpu_custom_call.1} parent=11 // pred_check_branch
          %257 = sbr.rel (%p255) target = $region36
        $region35: #{tpu_custom_call.1} parent=11 // pred_region
          _
        $region36: #{tpu_custom_call.1} parent=11 // pred_fallthru
          _
      $region12: #{tpu_custom_call.1} parent=5 // pred_fallthru
        _
      %p258 = scmp.lt.s32.totalorder %s21, 2
      // Predicated region
      $region37: #{tpu_custom_call.1} parent=5 // pred_check
        %p259 = pneg %p258
      $region38: #{tpu_custom_call.1} parent=5 // pred_check_branch
        %261 = sbr.rel (%p259) target = $region40
      $region39: #{tpu_custom_call.1} parent=5 // pred_region
        // Predicated region
        $region41: #{tpu_custom_call.1} parent=39 // pred_check
          %p262 = pneg %p41
        $region42: #{tpu_custom_call.1} parent=39 // pred_check_branch
          %264 = sbr.rel (%p262) target = $region44
        $region43: #{tpu_custom_call.1} parent=39 // pred_region
          %p265 = scmp.lt.s32.totalorder %s21, 1
          %s266 = scalar_select %p265, %s21, 1
          %s267 = smul.addr %s266, 54
          %s268 = smul.addr %s267, 4
          %s269 = scalar_lea.vmem %s0, %s268
        $region44: #{tpu_custom_call.1} parent=39 // pred_fallthru
          _
      $region40: #{tpu_custom_call.1} parent=5 // pred_fallthru
        _
      %p270 = scmp.le.s32.totalorder 1, %s21
      %p271 = scmp.lt.s32.totalorder %s21, 3
      %p272 = pnand %p270, %p271
      %p273 = pneg %p272
      // Predicated region
      $region45: #{tpu_custom_call.1} parent=5 // pred_check
        _
      $region46: #{tpu_custom_call.1} parent=5 // pred_check_branch
        %275 = sbr.rel (%p272) target = $region48
      $region47: #{tpu_custom_call.1} parent=5 // pred_region
        %s276 = ssub.s32 %s21, 1
        %p277 = scmp.lt.s32.totalorder %s26, 1
        %s278 = scalar_select %p277, %s26, 1
        %s279 = smul.addr %s278, 54
        %s280 = smul.addr %s279, 4
        %s281 = scalar_lea.vmem %s0, %s280
        %p282 = pneg %p47
        %p283 = pneg %p44
        %p284 = pneg %p68
        %p285 = pneg %p65
        %p286 = pneg %p89
        %p287 = pneg %p86
        %p288 = pneg %p110
        %p289 = pneg %p107
        %p290 = pneg %p131
        %p291 = pneg %p128
        %p292 = pneg %p152
        %p293 = pneg %p149
        %p294 = pneg %p173
        %p295 = pneg %p170
        %p296 = pneg %p199
        %p297 = pneg %p196
        %s298 = sand.u32 %s186, 1
        %s299 = scalar_lea.sflag [#allocation3], %s298
        %s300 = sand.u32 %s186, 1
        %s301 = smul.addr %s300, 128
        %s302 = scalar_lea.vmem [#allocation2], %s301
        %p303 = pneg %p225
        %p304 = pneg %p222
        %s305 = sand.u32 %s212, 1
        %s306 = scalar_lea.sflag [#allocation5], %s305
        %s307 = sand.u32 %s212, 1
        %s308 = smul.addr %s307, 128
        %s309 = scalar_lea.vmem [#allocation4], %s308
        %p310 = scmp.lt.s32.totalorder %s26, 1
        %s311 = scalar_select %p310, %s26, 1
        %s312 = smul.addr %s311, 54
        %s313 = smul.addr %s312, 4
        %s314 = scalar_lea.vmem %s0, %s313
        %v316 = vld [vmem:[%s314] sm:$0xf]
        %v317 = vld [vmem:[%s314 + $0x4] sm:$0xf]
        %v318 = vld [vmem:[%s314 + $0x8] sm:$0x1]
        %v319 = vld [vmem:[%s314 + $0xc] sm:$0xf]
        %v320 = vld [vmem:[%s314 + $0x10] sm:$0xf]
        %v321 = vld [vmem:[%s314 + $0x14] sm:$0x1]
        %v322 = vld [vmem:[%s314 + $0x18] sm:$0xf]
        %v323 = vld [vmem:[%s314 + $0x1c] sm:$0xf]
        %v324 = vld [vmem:[%s314 + $0x20] sm:$0x1]
        %v325 = vld [vmem:[%s314 + $0x24] sm:$0xf]
        %v326 = vld [vmem:[%s314 + $0x28] sm:$0xf]
        %v327 = vld [vmem:[%s314 + $0x2c] sm:$0x1]
        %v328 = vld [vmem:[%s314 + $0x30] sm:$0xf]
        %v329 = vld [vmem:[%s314 + $0x34] sm:$0xf]
        %v330 = vld [vmem:[%s314 + $0x38] sm:$0x1]
        %v331 = vld [vmem:[%s314 + $0x3c] sm:$0xf]
        %v332 = vld [vmem:[%s314 + $0x40] sm:$0xf]
        %v333 = vld [vmem:[%s314 + $0x44] sm:$0x1]
        %v334 = vld [vmem:[%s314 + $0x48] sm:$0xf]
        %v335 = vld [vmem:[%s314 + $0x4c] sm:$0xf]
        %v336 = vld [vmem:[%s314 + $0x50] sm:$0x1]
        %v337 = vld [vmem:[%s314 + $0x54] sm:$0xf]
        %v338 = vld [vmem:[%s314 + $0x58] sm:$0xf]
        %v339 = vld [vmem:[%s314 + $0x5c] sm:$0x1]
        %v340 = vld [vmem:[%s314 + $0x60] sm:$0xf]
        %v341 = vld [vmem:[%s314 + $0x64] sm:$0xf]
        %v342 = vld [vmem:[%s314 + $0x68] sm:$0x1]
        %v343 = vld [vmem:[%s314 + $0x6c] sm:$0xf]
        %v344 = vld [vmem:[%s314 + $0x70] sm:$0xf]
        %v345 = vld [vmem:[%s314 + $0x74] sm:$0x1]
        %v346 = vld [vmem:[%s314 + $0x78] sm:$0xf]
        %v347 = vld [vmem:[%s314 + $0x7c] sm:$0xf]
        %v348 = vld [vmem:[%s314 + $0x80] sm:$0x1]
        %v349 = vld [vmem:[%s314 + $0x84] sm:$0xf]
        %v350 = vld [vmem:[%s314 + $0x88] sm:$0xf]
        %v351 = vld [vmem:[%s314 + $0x8c] sm:$0x1]
        %v352 = vld [vmem:[%s314 + $0x90] sm:$0xf]
        %v353 = vld [vmem:[%s314 + $0x94] sm:$0xf]
        %v354 = vld [vmem:[%s314 + $0x98] sm:$0x1]
        %v355 = vld [vmem:[%s314 + $0x9c] sm:$0xf]
        %v356 = vld [vmem:[%s314 + $0xa0] sm:$0xf]
        %v357 = vld [vmem:[%s314 + $0xa4] sm:$0x1]
        %v358 = vld [vmem:[%s314 + $0xa8] sm:$0xf]
        %v359 = vld [vmem:[%s314 + $0xac] sm:$0xf]
        %v360 = vld [vmem:[%s314 + $0xb0] sm:$0x1]
        %v361 = vld [vmem:[%s314 + $0xb4] sm:$0xf]
        %v362 = vld [vmem:[%s314 + $0xb8] sm:$0xf]
        %v363 = vld [vmem:[%s314 + $0xbc] sm:$0x1]
        %v364 = vld [vmem:[%s314 + $0xc0] sm:$0xf]
        %v365 = vld [vmem:[%s314 + $0xc4] sm:$0xf]
        %v366 = vld [vmem:[%s314 + $0xc8] sm:$0x1]
        %v367 = vld [vmem:[%s314 + $0xcc] sm:$0xf]
        %v368 = vld [vmem:[%s314 + $0xd0] sm:$0xf]
        %v369 = vld [vmem:[%s314 + $0xd4] sm:$0x1]
        %v370 = vunpack.c.l.bf16 %v316
        %v371 = vunpack.c.l.bf16 %v317
        %v372 = vunpack.c.l.bf16 %v318
        %v373 = vunpack.c.l.bf16 %v319
        %v374 = vunpack.c.l.bf16 %v320
        %v375 = vunpack.c.l.bf16 %v321
        %v376 = vunpack.c.l.bf16 %v322
        %v377 = vunpack.c.l.bf16 %v323
        %v378 = vunpack.c.l.bf16 %v324
        %v379 = vunpack.c.l.bf16 %v325
        %v380 = vunpack.c.l.bf16 %v326
        %v381 = vunpack.c.l.bf16 %v327
        %v382 = vunpack.c.l.bf16 %v328
        %v383 = vunpack.c.l.bf16 %v329
        %v384 = vunpack.c.l.bf16 %v330
        %v385 = vunpack.c.l.bf16 %v331
        %v386 = vunpack.c.l.bf16 %v332
        %v387 = vunpack.c.l.bf16 %v333
        %v388 = vunpack.c.l.bf16 %v334
        %v389 = vunpack.c.l.bf16 %v335
        %v390 = vunpack.c.l.bf16 %v336
        %v391 = vunpack.c.l.bf16 %v337
        %v392 = vunpack.c.l.bf16 %v338
        %v393 = vunpack.c.l.bf16 %v339
        %v394 = vunpack.c.l.bf16 %v340
        %v395 = vunpack.c.l.bf16 %v341
        %v396 = vunpack.c.l.bf16 %v342
        %v397 = vunpack.c.l.bf16 %v343
        %v398 = vunpack.c.l.bf16 %v344
        %v399 = vunpack.c.l.bf16 %v345
        %v400 = vunpack.c.l.bf16 %v346
        %v401 = vunpack.c.l.bf16 %v347
        %v402 = vunpack.c.l.bf16 %v348
        %v403 = vunpack.c.l.bf16 %v349
        %v404 = vunpack.c.l.bf16 %v350
        %v405 = vunpack.c.l.bf16 %v351
        %v406 = vunpack.c.l.bf16 %v352
        %v407 = vunpack.c.l.bf16 %v353
        %v408 = vunpack.c.l.bf16 %v354
        %v409 = vunpack.c.l.bf16 %v355
        %v410 = vunpack.c.l.bf16 %v356
        %v411 = vunpack.c.l.bf16 %v357
        %v412 = vunpack.c.l.bf16 %v358
        %v413 = vunpack.c.l.bf16 %v359
        %v414 = vunpack.c.l.bf16 %v360
        %v415 = vunpack.c.l.bf16 %v361
        %v416 = vunpack.c.l.bf16 %v362
        %v417 = vunpack.c.l.bf16 %v363
        %v418 = vunpack.c.l.bf16 %v364
        %v419 = vunpack.c.l.bf16 %v365
        %v420 = vunpack.c.l.bf16 %v366
        %v421 = vunpack.c.l.bf16 %v367
        %v422 = vunpack.c.l.bf16 %v368
        %v423 = vunpack.c.l.bf16 %v369
        %vm472 = vcmask 1046528
        %v473 = vrot.slane %v370, 1
        %v474 = vrot.slane %v371, 1
        %v475 = vsel %vm472, %v473, %v474
        %v476 = vrot.slane %v372, 1
        %v477 = vsel %vm472, %v474, %v476
        %v478 = vrot.slane %v373, 1
        %v479 = vrot.slane %v374, 1
        %v480 = vsel %vm472, %v478, %v479
        %v481 = vrot.slane %v375, 1
        %v482 = vsel %vm472, %v479, %v481
        %v483 = vrot.slane %v376, 1
        %v484 = vrot.slane %v377, 1
        %v485 = vsel %vm472, %v483, %v484
        %v486 = vrot.slane %v378, 1
        %v487 = vsel %vm472, %v484, %v486
        %v488 = vrot.slane %v379, 1
        %v489 = vrot.slane %v380, 1
        %v490 = vsel %vm472, %v488, %v489
        %v491 = vrot.slane %v381, 1
        %v492 = vsel %vm472, %v489, %v491
        %v493 = vrot.slane %v382, 1
        %v494 = vrot.slane %v383, 1
        %v495 = vsel %vm472, %v493, %v494
        %v496 = vrot.slane %v384, 1
        %v497 = vsel %vm472, %v494, %v496
        %v498 = vrot.slane %v385, 1
        %v499 = vrot.slane %v386, 1
        %v500 = vsel %vm472, %v498, %v499
        %v501 = vrot.slane %v387, 1
        %v502 = vsel %vm472, %v499, %v501
        %v503 = vrot.slane %v388, 1
        %v504 = vrot.slane %v389, 1
        %v505 = vsel %vm472, %v503, %v504
        %v506 = vrot.slane %v390, 1
        %v507 = vsel %vm472, %v504, %v506
        %v508 = vrot.slane %v391, 1
        %v509 = vrot.slane %v392, 1
        %v510 = vsel %vm472, %v508, %v509
        %v511 = vrot.slane %v393, 1
        %v512 = vsel %vm472, %v509, %v511
        %v513 = vrot.slane %v394, 1
        %v514 = vrot.slane %v395, 1
        %v515 = vsel %vm472, %v513, %v514
        %v516 = vrot.slane %v396, 1
        %v517 = vsel %vm472, %v514, %v516
        %v518 = vrot.slane %v397, 1
        %v519 = vrot.slane %v398, 1
        %v520 = vsel %vm472, %v518, %v519
        %v521 = vrot.slane %v399, 1
        %v522 = vsel %vm472, %v519, %v521
        %v523 = vrot.slane %v400, 1
        %v524 = vrot.slane %v401, 1
        %v525 = vsel %vm472, %v523, %v524
        %v526 = vrot.slane %v402, 1
        %v527 = vsel %vm472, %v524, %v526
        %v528 = vrot.slane %v403, 1
        %v529 = vrot.slane %v404, 1
        %v530 = vsel %vm472, %v528, %v529
        %v531 = vrot.slane %v405, 1
        %v532 = vsel %vm472, %v529, %v531
        %v533 = vrot.slane %v406, 1
        %v534 = vrot.slane %v407, 1
        %v535 = vsel %vm472, %v533, %v534
        %v536 = vrot.slane %v408, 1
        %v537 = vsel %vm472, %v534, %v536
        %v538 = vrot.slane %v409, 1
        %v539 = vrot.slane %v410, 1
        %v540 = vsel %vm472, %v538, %v539
        %v541 = vrot.slane %v411, 1
        %v542 = vsel %vm472, %v539, %v541
        %v543 = vrot.slane %v412, 1
        %v544 = vrot.slane %v413, 1
        %v545 = vsel %vm472, %v543, %v544
        %v546 = vrot.slane %v414, 1
        %v547 = vsel %vm472, %v544, %v546
        %v548 = vrot.slane %v415, 1
        %v549 = vrot.slane %v416, 1
        %v550 = vsel %vm472, %v548, %v549
        %v551 = vrot.slane %v417, 1
        %v552 = vsel %vm472, %v549, %v551
        %vm553 = vcmask 1045504
        %v554 = vrot.slane %v370, 2
        %v555 = vrot.slane %v371, 2
        %v556 = vsel %vm553, %v554, %v555
        %v557 = vrot.slane %v372, 2
        %v558 = vsel %vm553, %v555, %v557
        %v559 = vrot.slane %v373, 2
        %v560 = vrot.slane %v374, 2
        %v561 = vsel %vm553, %v559, %v560
        %v562 = vrot.slane %v375, 2
        %v563 = vsel %vm553, %v560, %v562
        %v564 = vrot.slane %v376, 2
        %v565 = vrot.slane %v377, 2
        %v566 = vsel %vm553, %v564, %v565
        %v567 = vrot.slane %v378, 2
        %v568 = vsel %vm553, %v565, %v567
        %v569 = vrot.slane %v379, 2
        %v570 = vrot.slane %v380, 2
        %v571 = vsel %vm553, %v569, %v570
        %v572 = vrot.slane %v381, 2
        %v573 = vsel %vm553, %v570, %v572
        %v574 = vrot.slane %v382, 2
        %v575 = vrot.slane %v383, 2
        %v576 = vsel %vm553, %v574, %v575
        %v577 = vrot.slane %v384, 2
        %v578 = vsel %vm553, %v575, %v577
        %v579 = vrot.slane %v385, 2
        %v580 = vrot.slane %v386, 2
        %v581 = vsel %vm553, %v579, %v580
        %v582 = vrot.slane %v387, 2
        %v583 = vsel %vm553, %v580, %v582
        %v584 = vrot.slane %v388, 2
        %v585 = vrot.slane %v389, 2
        %v586 = vsel %vm553, %v584, %v585
        %v587 = vrot.slane %v390, 2
        %v588 = vsel %vm553, %v585, %v587
        %v589 = vrot.slane %v391, 2
        %v590 = vrot.slane %v392, 2
        %v591 = vsel %vm553, %v589, %v590
        %v592 = vrot.slane %v393, 2
        %v593 = vsel %vm553, %v590, %v592
        %v594 = vrot.slane %v394, 2
        %v595 = vrot.slane %v395, 2
        %v596 = vsel %vm553, %v594, %v595
        %v597 = vrot.slane %v396, 2
        %v598 = vsel %vm553, %v595, %v597
        %v599 = vrot.slane %v397, 2
        %v600 = vrot.slane %v398, 2
        %v601 = vsel %vm553, %v599, %v600
        %v602 = vrot.slane %v399, 2
        %v603 = vsel %vm553, %v600, %v602
        %v604 = vrot.slane %v400, 2
        %v605 = vrot.slane %v401, 2
        %v606 = vsel %vm553, %v604, %v605
        %v607 = vrot.slane %v402, 2
        %v608 = vsel %vm553, %v605, %v607
        %v609 = vrot.slane %v403, 2
        %v610 = vrot.slane %v404, 2
        %v611 = vsel %vm553, %v609, %v610
        %v612 = vrot.slane %v405, 2
        %v613 = vsel %vm553, %v610, %v612
        %v614 = vrot.slane %v406, 2
        %v615 = vrot.slane %v407, 2
        %v616 = vsel %vm553, %v614, %v615
        %v617 = vrot.slane %v408, 2
        %v618 = vsel %vm553, %v615, %v617
        %v619 = vrot.slane %v409, 2
        %v620 = vrot.slane %v410, 2
        %v621 = vsel %vm553, %v619, %v620
        %v622 = vrot.slane %v411, 2
        %v623 = vsel %vm553, %v620, %v622
        %v624 = vrot.slane %v412, 2
        %v625 = vrot.slane %v413, 2
        %v626 = vsel %vm553, %v624, %v625
        %v627 = vrot.slane %v414, 2
        %v628 = vsel %vm553, %v625, %v627
        %v629 = vrot.slane %v415, 2
        %v630 = vrot.slane %v416, 2
        %v631 = vsel %vm553, %v629, %v630
        %v632 = vrot.slane %v417, 2
        %v633 = vsel %vm553, %v630, %v632
        %v637 = vrot.slane %v418, 1
        %v638 = vrot.slane %v419, 1
        %v639 = vsel %vm472, %v637, %v638
        %v640 = vrot.slane %v420, 1
        %v641 = vsel %vm472, %v638, %v640
        %v674 = vrot.slane %v418, 2
        %v675 = vrot.slane %v419, 2
        %v676 = vsel %vm553, %v674, %v675
        %v677 = vrot.slane %v420, 2
        %v678 = vsel %vm553, %v675, %v677
        %v682 = vrot.slane %v421, 1
        %v683 = vrot.slane %v422, 1
        %v684 = vsel %vm472, %v682, %v683
        %v685 = vrot.slane %v423, 1
        %v686 = vsel %vm472, %v683, %v685
        %v687 = vrot.slane %v421, 2
        %v688 = vrot.slane %v422, 2
        %v689 = vsel %vm553, %v687, %v688
        %v690 = vrot.slane %v423, 2
        %v691 = vsel %vm553, %v688, %v690
        %692 = vrot.lane.b32.xlu0 %v475, 4
        %v693 = vpop.permute.xlu0 %692
        %694 = vrot.lane.b32.xlu0 %v477, 4
        %v695 = vpop.permute.xlu0 %694
        %696 = vrot.lane.b32.xlu0 %v480, 4
        %v697 = vpop.permute.xlu0 %696
        %698 = vrot.lane.b32.xlu0 %v482, 4
        %v699 = vpop.permute.xlu0 %698
        %700 = vrot.lane.b32.xlu0 %v485, 4
        %v701 = vpop.permute.xlu0 %700
        %702 = vrot.lane.b32.xlu0 %v487, 4
        %v703 = vpop.permute.xlu0 %702
        %704 = vrot.lane.b32.xlu0 %v490, 4
        %v705 = vpop.permute.xlu0 %704
        %706 = vrot.lane.b32.xlu0 %v492, 4
        %v707 = vpop.permute.xlu0 %706
        %708 = vrot.lane.b32.xlu0 %v495, 4
        %v709 = vpop.permute.xlu0 %708
        %710 = vrot.lane.b32.xlu0 %v497, 4
        %v711 = vpop.permute.xlu0 %710
        %712 = vrot.lane.b32.xlu0 %v500, 4
        %v713 = vpop.permute.xlu0 %712
        %714 = vrot.lane.b32.xlu0 %v502, 4
        %v715 = vpop.permute.xlu0 %714
        %716 = vrot.lane.b32.xlu0 %v505, 4
        %v717 = vpop.permute.xlu0 %716
        %718 = vrot.lane.b32.xlu0 %v507, 4
        %v719 = vpop.permute.xlu0 %718
        %720 = vrot.lane.b32.xlu0 %v510, 4
        %v721 = vpop.permute.xlu0 %720
        %722 = vrot.lane.b32.xlu0 %v512, 4
        %v723 = vpop.permute.xlu0 %722
        %724 = vrot.lane.b32.xlu0 %v515, 4
        %v725 = vpop.permute.xlu0 %724
        %726 = vrot.lane.b32.xlu0 %v517, 4
        %v727 = vpop.permute.xlu0 %726
        %728 = vrot.lane.b32.xlu0 %v520, 4
        %v729 = vpop.permute.xlu0 %728
        %730 = vrot.lane.b32.xlu0 %v522, 4
        %v731 = vpop.permute.xlu0 %730
        %732 = vrot.lane.b32.xlu0 %v525, 4
        %v733 = vpop.permute.xlu0 %732
        %734 = vrot.lane.b32.xlu0 %v527, 4
        %v735 = vpop.permute.xlu0 %734
        %736 = vrot.lane.b32.xlu0 %v530, 4
        %v737 = vpop.permute.xlu0 %736
        %738 = vrot.lane.b32.xlu0 %v532, 4
        %v739 = vpop.permute.xlu0 %738
        %740 = vrot.lane.b32.xlu0 %v535, 4
        %v741 = vpop.permute.xlu0 %740
        %742 = vrot.lane.b32.xlu0 %v537, 4
        %v743 = vpop.permute.xlu0 %742
        %744 = vrot.lane.b32.xlu0 %v540, 4
        %v745 = vpop.permute.xlu0 %744
        %746 = vrot.lane.b32.xlu0 %v542, 4
        %v747 = vpop.permute.xlu0 %746
        %748 = vrot.lane.b32.xlu0 %v545, 4
        %v749 = vpop.permute.xlu0 %748
        %750 = vrot.lane.b32.xlu0 %v547, 4
        %v751 = vpop.permute.xlu0 %750
        %752 = vrot.lane.b32.xlu0 %v550, 4
        %v753 = vpop.permute.xlu0 %752
        %754 = vrot.lane.b32.xlu0 %v552, 4
        %v755 = vpop.permute.xlu0 %754
        %788 = vrot.lane.b32.xlu0 %v556, 8
        %v789 = vpop.permute.xlu0 %788
        %790 = vrot.lane.b32.xlu0 %v558, 8
        %v791 = vpop.permute.xlu0 %790
        %792 = vrot.lane.b32.xlu0 %v561, 8
        %v793 = vpop.permute.xlu0 %792
        %794 = vrot.lane.b32.xlu0 %v563, 8
        %v795 = vpop.permute.xlu0 %794
        %796 = vrot.lane.b32.xlu0 %v566, 8
        %v797 = vpop.permute.xlu0 %796
        %798 = vrot.lane.b32.xlu0 %v568, 8
        %v799 = vpop.permute.xlu0 %798
        %800 = vrot.lane.b32.xlu0 %v571, 8
        %v801 = vpop.permute.xlu0 %800
        %802 = vrot.lane.b32.xlu0 %v573, 8
        %v803 = vpop.permute.xlu0 %802
        %804 = vrot.lane.b32.xlu0 %v576, 8
        %v805 = vpop.permute.xlu0 %804
        %806 = vrot.lane.b32.xlu0 %v578, 8
        %v807 = vpop.permute.xlu0 %806
        %808 = vrot.lane.b32.xlu0 %v581, 8
        %v809 = vpop.permute.xlu0 %808
        %810 = vrot.lane.b32.xlu0 %v583, 8
        %v811 = vpop.permute.xlu0 %810
        %812 = vrot.lane.b32.xlu0 %v586, 8
        %v813 = vpop.permute.xlu0 %812
        %814 = vrot.lane.b32.xlu0 %v588, 8
        %v815 = vpop.permute.xlu0 %814
        %816 = vrot.lane.b32.xlu0 %v591, 8
        %v817 = vpop.permute.xlu0 %816
        %818 = vrot.lane.b32.xlu0 %v593, 8
        %v819 = vpop.permute.xlu0 %818
        %820 = vrot.lane.b32.xlu0 %v596, 8
        %v821 = vpop.permute.xlu0 %820
        %822 = vrot.lane.b32.xlu0 %v598, 8
        %v823 = vpop.permute.xlu0 %822
        %824 = vrot.lane.b32.xlu0 %v601, 8
        %v825 = vpop.permute.xlu0 %824
        %826 = vrot.lane.b32.xlu0 %v603, 8
        %v827 = vpop.permute.xlu0 %826
        %828 = vrot.lane.b32.xlu0 %v606, 8
        %v829 = vpop.permute.xlu0 %828
        %830 = vrot.lane.b32.xlu0 %v608, 8
        %v831 = vpop.permute.xlu0 %830
        %832 = vrot.lane.b32.xlu0 %v611, 8
        %v833 = vpop.permute.xlu0 %832
        %834 = vrot.lane.b32.xlu0 %v613, 8
        %v835 = vpop.permute.xlu0 %834
        %836 = vrot.lane.b32.xlu0 %v616, 8
        %v837 = vpop.permute.xlu0 %836
        %838 = vrot.lane.b32.xlu0 %v618, 8
        %v839 = vpop.permute.xlu0 %838
        %840 = vrot.lane.b32.xlu0 %v621, 8
        %v841 = vpop.permute.xlu0 %840
        %842 = vrot.lane.b32.xlu0 %v623, 8
        %v843 = vpop.permute.xlu0 %842
        %844 = vrot.lane.b32.xlu0 %v626, 8
        %v845 = vpop.permute.xlu0 %844
        %846 = vrot.lane.b32.xlu0 %v628, 8
        %v847 = vpop.permute.xlu0 %846
        %848 = vrot.lane.b32.xlu0 %v631, 8
        %v849 = vpop.permute.xlu0 %848
        %850 = vrot.lane.b32.xlu0 %v633, 8
        %v851 = vpop.permute.xlu0 %850
        %884 = vrot.lane.b32.xlu0 %v373, 12
        %v885 = vpop.permute.xlu0 %884
        %886 = vrot.lane.b32.xlu0 %v374, 12
        %v887 = vpop.permute.xlu0 %886
        %888 = vrot.lane.b32.xlu0 %v376, 12
        %v889 = vpop.permute.xlu0 %888
        %890 = vrot.lane.b32.xlu0 %v377, 12
        %v891 = vpop.permute.xlu0 %890
        %892 = vrot.lane.b32.xlu0 %v379, 12
        %v893 = vpop.permute.xlu0 %892
        %894 = vrot.lane.b32.xlu0 %v380, 12
        %v895 = vpop.permute.xlu0 %894
        %896 = vrot.lane.b32.xlu0 %v382, 12
        %v897 = vpop.permute.xlu0 %896
        %898 = vrot.lane.b32.xlu0 %v383, 12
        %v899 = vpop.permute.xlu0 %898
        %900 = vrot.lane.b32.xlu0 %v385, 12
        %v901 = vpop.permute.xlu0 %900
        %902 = vrot.lane.b32.xlu0 %v386, 12
        %v903 = vpop.permute.xlu0 %902
        %904 = vrot.lane.b32.xlu0 %v388, 12
        %v905 = vpop.permute.xlu0 %904
        %906 = vrot.lane.b32.xlu0 %v389, 12
        %v907 = vpop.permute.xlu0 %906
        %908 = vrot.lane.b32.xlu0 %v391, 12
        %v909 = vpop.permute.xlu0 %908
        %910 = vrot.lane.b32.xlu0 %v392, 12
        %v911 = vpop.permute.xlu0 %910
        %912 = vrot.lane.b32.xlu0 %v394, 12
        %v913 = vpop.permute.xlu0 %912
        %914 = vrot.lane.b32.xlu0 %v395, 12
        %v915 = vpop.permute.xlu0 %914
        %916 = vrot.lane.b32.xlu0 %v397, 12
        %v917 = vpop.permute.xlu0 %916
        %918 = vrot.lane.b32.xlu0 %v398, 12
        %v919 = vpop.permute.xlu0 %918
        %920 = vrot.lane.b32.xlu0 %v400, 12
        %v921 = vpop.permute.xlu0 %920
        %922 = vrot.lane.b32.xlu0 %v401, 12
        %v923 = vpop.permute.xlu0 %922
        %924 = vrot.lane.b32.xlu0 %v403, 12
        %v925 = vpop.permute.xlu0 %924
        %926 = vrot.lane.b32.xlu0 %v404, 12
        %v927 = vpop.permute.xlu0 %926
        %928 = vrot.lane.b32.xlu0 %v406, 12
        %v929 = vpop.permute.xlu0 %928
        %930 = vrot.lane.b32.xlu0 %v407, 12
        %v931 = vpop.permute.xlu0 %930
        %932 = vrot.lane.b32.xlu0 %v409, 12
        %v933 = vpop.permute.xlu0 %932
        %934 = vrot.lane.b32.xlu0 %v410, 12
        %v935 = vpop.permute.xlu0 %934
        %936 = vrot.lane.b32.xlu0 %v412, 12
        %v937 = vpop.permute.xlu0 %936
        %938 = vrot.lane.b32.xlu0 %v413, 12
        %v939 = vpop.permute.xlu0 %938
        %940 = vrot.lane.b32.xlu0 %v415, 12
        %v941 = vpop.permute.xlu0 %940
        %942 = vrot.lane.b32.xlu0 %v416, 12
        %v943 = vpop.permute.xlu0 %942
        %944 = vrot.lane.b32.xlu0 %v418, 12
        %v945 = vpop.permute.xlu0 %944
        %946 = vrot.lane.b32.xlu0 %v419, 12
        %v947 = vpop.permute.xlu0 %946
        %980 = vrot.lane.b32.xlu0 %v480, 16
        %v981 = vpop.permute.xlu0 %980
        %982 = vrot.lane.b32.xlu0 %v482, 16
        %v983 = vpop.permute.xlu0 %982
        %984 = vrot.lane.b32.xlu0 %v485, 16
        %v985 = vpop.permute.xlu0 %984
        %986 = vrot.lane.b32.xlu0 %v487, 16
        %v987 = vpop.permute.xlu0 %986
        %988 = vrot.lane.b32.xlu0 %v490, 16
        %v989 = vpop.permute.xlu0 %988
        %990 = vrot.lane.b32.xlu0 %v492, 16
        %v991 = vpop.permute.xlu0 %990
        %992 = vrot.lane.b32.xlu0 %v495, 16
        %v993 = vpop.permute.xlu0 %992
        %994 = vrot.lane.b32.xlu0 %v497, 16
        %v995 = vpop.permute.xlu0 %994
        %996 = vrot.lane.b32.xlu0 %v500, 16
        %v997 = vpop.permute.xlu0 %996
        %998 = vrot.lane.b32.xlu0 %v502, 16
        %v999 = vpop.permute.xlu0 %998
        %1000 = vrot.lane.b32.xlu0 %v505, 16
        %v1001 = vpop.permute.xlu0 %1000
        %1002 = vrot.lane.b32.xlu0 %v507, 16
        %v1003 = vpop.permute.xlu0 %1002
        %1004 = vrot.lane.b32.xlu0 %v510, 16
        %v1005 = vpop.permute.xlu0 %1004
        %1006 = vrot.lane.b32.xlu0 %v512, 16
        %v1007 = vpop.permute.xlu0 %1006
        %1008 = vrot.lane.b32.xlu0 %v515, 16
        %v1009 = vpop.permute.xlu0 %1008
        %1010 = vrot.lane.b32.xlu0 %v517, 16
        %v1011 = vpop.permute.xlu0 %1010
        %1012 = vrot.lane.b32.xlu0 %v520, 16
        %v1013 = vpop.permute.xlu0 %1012
        %1014 = vrot.lane.b32.xlu0 %v522, 16
        %v1015 = vpop.permute.xlu0 %1014
        %1016 = vrot.lane.b32.xlu0 %v525, 16
        %v1017 = vpop.permute.xlu0 %1016
        %1018 = vrot.lane.b32.xlu0 %v527, 16
        %v1019 = vpop.permute.xlu0 %1018
        %1020 = vrot.lane.b32.xlu0 %v530, 16
        %v1021 = vpop.permute.xlu0 %1020
        %1022 = vrot.lane.b32.xlu0 %v532, 16
        %v1023 = vpop.permute.xlu0 %1022
        %1024 = vrot.lane.b32.xlu0 %v535, 16
        %v1025 = vpop.permute.xlu0 %1024
        %1026 = vrot.lane.b32.xlu0 %v537, 16
        %v1027 = vpop.permute.xlu0 %1026
        %1028 = vrot.lane.b32.xlu0 %v540, 16
        %v1029 = vpop.permute.xlu0 %1028
        %1030 = vrot.lane.b32.xlu0 %v542, 16
        %v1031 = vpop.permute.xlu0 %1030
        %1032 = vrot.lane.b32.xlu0 %v545, 16
        %v1033 = vpop.permute.xlu0 %1032
        %1034 = vrot.lane.b32.xlu0 %v547, 16
        %v1035 = vpop.permute.xlu0 %1034
        %1036 = vrot.lane.b32.xlu0 %v550, 16
        %v1037 = vpop.permute.xlu0 %1036
        %1038 = vrot.lane.b32.xlu0 %v552, 16
        %v1039 = vpop.permute.xlu0 %1038
        %1040 = vrot.lane.b32.xlu0 %v639, 16
        %v1041 = vpop.permute.xlu0 %1040
        %1042 = vrot.lane.b32.xlu0 %v641, 16
        %v1043 = vpop.permute.xlu0 %1042
        %1076 = vrot.lane.b32.xlu0 %v561, 20
        %v1077 = vpop.permute.xlu0 %1076
        %1078 = vrot.lane.b32.xlu0 %v563, 20
        %v1079 = vpop.permute.xlu0 %1078
        %1080 = vrot.lane.b32.xlu0 %v566, 20
        %v1081 = vpop.permute.xlu0 %1080
        %1082 = vrot.lane.b32.xlu0 %v568, 20
        %v1083 = vpop.permute.xlu0 %1082
        %1084 = vrot.lane.b32.xlu0 %v571, 20
        %v1085 = vpop.permute.xlu0 %1084
        %1086 = vrot.lane.b32.xlu0 %v573, 20
        %v1087 = vpop.permute.xlu0 %1086
        %1088 = vrot.lane.b32.xlu0 %v576, 20
        %v1089 = vpop.permute.xlu0 %1088
        %1090 = vrot.lane.b32.xlu0 %v578, 20
        %v1091 = vpop.permute.xlu0 %1090
        %1092 = vrot.lane.b32.xlu0 %v581, 20
        %v1093 = vpop.permute.xlu0 %1092
        %1094 = vrot.lane.b32.xlu0 %v583, 20
        %v1095 = vpop.permute.xlu0 %1094
        %1096 = vrot.lane.b32.xlu0 %v586, 20
        %v1097 = vpop.permute.xlu0 %1096
        %1098 = vrot.lane.b32.xlu0 %v588, 20
        %v1099 = vpop.permute.xlu0 %1098
        %1100 = vrot.lane.b32.xlu0 %v591, 20
        %v1101 = vpop.permute.xlu0 %1100
        %1102 = vrot.lane.b32.xlu0 %v593, 20
        %v1103 = vpop.permute.xlu0 %1102
        %1104 = vrot.lane.b32.xlu0 %v596, 20
        %v1105 = vpop.permute.xlu0 %1104
        %1106 = vrot.lane.b32.xlu0 %v598, 20
        %v1107 = vpop.permute.xlu0 %1106
        %1108 = vrot.lane.b32.xlu0 %v601, 20
        %v1109 = vpop.permute.xlu0 %1108
        %1110 = vrot.lane.b32.xlu0 %v603, 20
        %v1111 = vpop.permute.xlu0 %1110
        %1112 = vrot.lane.b32.xlu0 %v606, 20
        %v1113 = vpop.permute.xlu0 %1112
        %1114 = vrot.lane.b32.xlu0 %v608, 20
        %v1115 = vpop.permute.xlu0 %1114
        %1116 = vrot.lane.b32.xlu0 %v611, 20
        %v1117 = vpop.permute.xlu0 %1116
        %1118 = vrot.lane.b32.xlu0 %v613, 20
        %v1119 = vpop.permute.xlu0 %1118
        %1120 = vrot.lane.b32.xlu0 %v616, 20
        %v1121 = vpop.permute.xlu0 %1120
        %1122 = vrot.lane.b32.xlu0 %v618, 20
        %v1123 = vpop.permute.xlu0 %1122
        %1124 = vrot.lane.b32.xlu0 %v621, 20
        %v1125 = vpop.permute.xlu0 %1124
        %1126 = vrot.lane.b32.xlu0 %v623, 20
        %v1127 = vpop.permute.xlu0 %1126
        %1128 = vrot.lane.b32.xlu0 %v626, 20
        %v1129 = vpop.permute.xlu0 %1128
        %1130 = vrot.lane.b32.xlu0 %v628, 20
        %v1131 = vpop.permute.xlu0 %1130
        %1132 = vrot.lane.b32.xlu0 %v631, 20
        %v1133 = vpop.permute.xlu0 %1132
        %1134 = vrot.lane.b32.xlu0 %v633, 20
        %v1135 = vpop.permute.xlu0 %1134
        %1136 = vrot.lane.b32.xlu0 %v676, 20
        %v1137 = vpop.permute.xlu0 %1136
        %1138 = vrot.lane.b32.xlu0 %v678, 20
        %v1139 = vpop.permute.xlu0 %1138
        %1172 = vrot.lane.b32.xlu0 %v376, 24
        %v1173 = vpop.permute.xlu0 %1172
        %1174 = vrot.lane.b32.xlu0 %v377, 24
        %v1175 = vpop.permute.xlu0 %1174
        %1176 = vrot.lane.b32.xlu0 %v379, 24
        %v1177 = vpop.permute.xlu0 %1176
        %1178 = vrot.lane.b32.xlu0 %v380, 24
        %v1179 = vpop.permute.xlu0 %1178
        %1180 = vrot.lane.b32.xlu0 %v382, 24
        %v1181 = vpop.permute.xlu0 %1180
        %1182 = vrot.lane.b32.xlu0 %v383, 24
        %v1183 = vpop.permute.xlu0 %1182
        %1184 = vrot.lane.b32.xlu0 %v385, 24
        %v1185 = vpop.permute.xlu0 %1184
        %1186 = vrot.lane.b32.xlu0 %v386, 24
        %v1187 = vpop.permute.xlu0 %1186
        %1188 = vrot.lane.b32.xlu0 %v388, 24
        %v1189 = vpop.permute.xlu0 %1188
        %1190 = vrot.lane.b32.xlu0 %v389, 24
        %v1191 = vpop.permute.xlu0 %1190
        %1192 = vrot.lane.b32.xlu0 %v391, 24
        %v1193 = vpop.permute.xlu0 %1192
        %1194 = vrot.lane.b32.xlu0 %v392, 24
        %v1195 = vpop.permute.xlu0 %1194
        %1196 = vrot.lane.b32.xlu0 %v394, 24
        %v1197 = vpop.permute.xlu0 %1196
        %1198 = vrot.lane.b32.xlu0 %v395, 24
        %v1199 = vpop.permute.xlu0 %1198
        %1200 = vrot.lane.b32.xlu0 %v397, 24
        %v1201 = vpop.permute.xlu0 %1200
        %1202 = vrot.lane.b32.xlu0 %v398, 24
        %v1203 = vpop.permute.xlu0 %1202
        %1204 = vrot.lane.b32.xlu0 %v400, 24
        %v1205 = vpop.permute.xlu0 %1204
        %1206 = vrot.lane.b32.xlu0 %v401, 24
        %v1207 = vpop.permute.xlu0 %1206
        %1208 = vrot.lane.b32.xlu0 %v403, 24
        %v1209 = vpop.permute.xlu0 %1208
        %1210 = vrot.lane.b32.xlu0 %v404, 24
        %v1211 = vpop.permute.xlu0 %1210
        %1212 = vrot.lane.b32.xlu0 %v406, 24
        %v1213 = vpop.permute.xlu0 %1212
        %1214 = vrot.lane.b32.xlu0 %v407, 24
        %v1215 = vpop.permute.xlu0 %1214
        %1216 = vrot.lane.b32.xlu0 %v409, 24
        %v1217 = vpop.permute.xlu0 %1216
        %1218 = vrot.lane.b32.xlu0 %v410, 24
        %v1219 = vpop.permute.xlu0 %1218
        %1220 = vrot.lane.b32.xlu0 %v412, 24
        %v1221 = vpop.permute.xlu0 %1220
        %1222 = vrot.lane.b32.xlu0 %v413, 24
        %v1223 = vpop.permute.xlu0 %1222
        %1224 = vrot.lane.b32.xlu0 %v415, 24
        %v1225 = vpop.permute.xlu0 %1224
        %1226 = vrot.lane.b32.xlu0 %v416, 24
        %v1227 = vpop.permute.xlu0 %1226
        %1228 = vrot.lane.b32.xlu0 %v418, 24
        %v1229 = vpop.permute.xlu0 %1228
        %1230 = vrot.lane.b32.xlu0 %v419, 24
        %v1231 = vpop.permute.xlu0 %1230
        %1232 = vrot.lane.b32.xlu0 %v421, 24
        %v1233 = vpop.permute.xlu0 %1232
        %1234 = vrot.lane.b32.xlu0 %v422, 24
        %v1235 = vpop.permute.xlu0 %1234
        %1268 = vrot.lane.b32.xlu0 %v485, 28
        %v1269 = vpop.permute.xlu0 %1268
        %1270 = vrot.lane.b32.xlu0 %v487, 28
        %v1271 = vpop.permute.xlu0 %1270
        %1272 = vrot.lane.b32.xlu0 %v490, 28
        %v1273 = vpop.permute.xlu0 %1272
        %1274 = vrot.lane.b32.xlu0 %v492, 28
        %v1275 = vpop.permute.xlu0 %1274
        %1276 = vrot.lane.b32.xlu0 %v495, 28
        %v1277 = vpop.permute.xlu0 %1276
        %1278 = vrot.lane.b32.xlu0 %v497, 28
        %v1279 = vpop.permute.xlu0 %1278
        %1280 = vrot.lane.b32.xlu0 %v500, 28
        %v1281 = vpop.permute.xlu0 %1280
        %1282 = vrot.lane.b32.xlu0 %v502, 28
        %v1283 = vpop.permute.xlu0 %1282
        %1284 = vrot.lane.b32.xlu0 %v505, 28
        %v1285 = vpop.permute.xlu0 %1284
        %1286 = vrot.lane.b32.xlu0 %v507, 28
        %v1287 = vpop.permute.xlu0 %1286
        %1288 = vrot.lane.b32.xlu0 %v510, 28
        %v1289 = vpop.permute.xlu0 %1288
        %1290 = vrot.lane.b32.xlu0 %v512, 28
        %v1291 = vpop.permute.xlu0 %1290
        %1292 = vrot.lane.b32.xlu0 %v515, 28
        %v1293 = vpop.permute.xlu0 %1292
        %1294 = vrot.lane.b32.xlu0 %v517, 28
        %v1295 = vpop.permute.xlu0 %1294
        %1296 = vrot.lane.b32.xlu0 %v520, 28
        %v1297 = vpop.permute.xlu0 %1296
        %1298 = vrot.lane.b32.xlu0 %v522, 28
        %v1299 = vpop.permute.xlu0 %1298
        %1300 = vrot.lane.b32.xlu0 %v525, 28
        %v1301 = vpop.permute.xlu0 %1300
        %1302 = vrot.lane.b32.xlu0 %v527, 28
        %v1303 = vpop.permute.xlu0 %1302
        %1304 = vrot.lane.b32.xlu0 %v530, 28
        %v1305 = vpop.permute.xlu0 %1304
        %1306 = vrot.lane.b32.xlu0 %v532, 28
        %v1307 = vpop.permute.xlu0 %1306
        %1308 = vrot.lane.b32.xlu0 %v535, 28
        %v1309 = vpop.permute.xlu0 %1308
        %1310 = vrot.lane.b32.xlu0 %v537, 28
        %v1311 = vpop.permute.xlu0 %1310
        %1312 = vrot.lane.b32.xlu0 %v540, 28
        %v1313 = vpop.permute.xlu0 %1312
        %1314 = vrot.lane.b32.xlu0 %v542, 28
        %v1315 = vpop.permute.xlu0 %1314
        %1316 = vrot.lane.b32.xlu0 %v545, 28
        %v1317 = vpop.permute.xlu0 %1316
        %1318 = vrot.lane.b32.xlu0 %v547, 28
        %v1319 = vpop.permute.xlu0 %1318
        %1320 = vrot.lane.b32.xlu0 %v550, 28
        %v1321 = vpop.permute.xlu0 %1320
        %1322 = vrot.lane.b32.xlu0 %v552, 28
        %v1323 = vpop.permute.xlu0 %1322
        %1324 = vrot.lane.b32.xlu0 %v639, 28
        %v1325 = vpop.permute.xlu0 %1324
        %1326 = vrot.lane.b32.xlu0 %v641, 28
        %v1327 = vpop.permute.xlu0 %1326
        %1328 = vrot.lane.b32.xlu0 %v684, 28
        %v1329 = vpop.permute.xlu0 %1328
        %1330 = vrot.lane.b32.xlu0 %v686, 28
        %v1331 = vpop.permute.xlu0 %1330
        %1364 = vrot.lane.b32.xlu0 %v566, 32
        %v1365 = vpop.permute.xlu0 %1364
        %1366 = vrot.lane.b32.xlu0 %v568, 32
        %v1367 = vpop.permute.xlu0 %1366
        %1368 = vrot.lane.b32.xlu0 %v571, 32
        %v1369 = vpop.permute.xlu0 %1368
        %1370 = vrot.lane.b32.xlu0 %v573, 32
        %v1371 = vpop.permute.xlu0 %1370
        %1372 = vrot.lane.b32.xlu0 %v576, 32
        %v1373 = vpop.permute.xlu0 %1372
        %1374 = vrot.lane.b32.xlu0 %v578, 32
        %v1375 = vpop.permute.xlu0 %1374
        %1376 = vrot.lane.b32.xlu0 %v581, 32
        %v1377 = vpop.permute.xlu0 %1376
        %1378 = vrot.lane.b32.xlu0 %v583, 32
        %v1379 = vpop.permute.xlu0 %1378
        %1380 = vrot.lane.b32.xlu0 %v586, 32
        %v1381 = vpop.permute.xlu0 %1380
        %1382 = vrot.lane.b32.xlu0 %v588, 32
        %v1383 = vpop.permute.xlu0 %1382
        %1384 = vrot.lane.b32.xlu0 %v591, 32
        %v1385 = vpop.permute.xlu0 %1384
        %1386 = vrot.lane.b32.xlu0 %v593, 32
        %v1387 = vpop.permute.xlu0 %1386
        %1388 = vrot.lane.b32.xlu0 %v596, 32
        %v1389 = vpop.permute.xlu0 %1388
        %1390 = vrot.lane.b32.xlu0 %v598, 32
        %v1391 = vpop.permute.xlu0 %1390
        %1392 = vrot.lane.b32.xlu0 %v601, 32
        %v1393 = vpop.permute.xlu0 %1392
        %1394 = vrot.lane.b32.xlu0 %v603, 32
        %v1395 = vpop.permute.xlu0 %1394
        %1396 = vrot.lane.b32.xlu0 %v606, 32
        %v1397 = vpop.permute.xlu0 %1396
        %1398 = vrot.lane.b32.xlu0 %v608, 32
        %v1399 = vpop.permute.xlu0 %1398
        %1400 = vrot.lane.b32.xlu0 %v611, 32
        %v1401 = vpop.permute.xlu0 %1400
        %1402 = vrot.lane.b32.xlu0 %v613, 32
        %v1403 = vpop.permute.xlu0 %1402
        %1404 = vrot.lane.b32.xlu0 %v616, 32
        %v1405 = vpop.permute.xlu0 %1404
        %1406 = vrot.lane.b32.xlu0 %v618, 32
        %v1407 = vpop.permute.xlu0 %1406
        %1408 = vrot.lane.b32.xlu0 %v621, 32
        %v1409 = vpop.permute.xlu0 %1408
        %1410 = vrot.lane.b32.xlu0 %v623, 32
        %v1411 = vpop.permute.xlu0 %1410
        %1412 = vrot.lane.b32.xlu0 %v626, 32
        %v1413 = vpop.permute.xlu0 %1412
        %1414 = vrot.lane.b32.xlu0 %v628, 32
        %v1415 = vpop.permute.xlu0 %1414
        %1416 = vrot.lane.b32.xlu0 %v631, 32
        %v1417 = vpop.permute.xlu0 %1416
        %1418 = vrot.lane.b32.xlu0 %v633, 32
        %v1419 = vpop.permute.xlu0 %1418
        %1420 = vrot.lane.b32.xlu0 %v676, 32
        %v1421 = vpop.permute.xlu0 %1420
        %1422 = vrot.lane.b32.xlu0 %v678, 32
        %v1423 = vpop.permute.xlu0 %1422
        %1424 = vrot.lane.b32.xlu0 %v689, 32
        %v1425 = vpop.permute.xlu0 %1424
        %1426 = vrot.lane.b32.xlu0 %v691, 32
        %v1427 = vpop.permute.xlu0 %1426
        %vm1460 = vcmask 31744
        %v1461 = vsel %vm1460, %v370, %v693
        %v1462 = vsel %vm1460, %v371, %v695
        %v1463 = vsel %vm1460, %v373, %v697
        %v1464 = vsel %vm1460, %v374, %v699
        %v1465 = vsel %vm1460, %v376, %v701
        %v1466 = vsel %vm1460, %v377, %v703
        %v1467 = vsel %vm1460, %v379, %v705
        %v1468 = vsel %vm1460, %v380, %v707
        %v1469 = vsel %vm1460, %v382, %v709
        %v1470 = vsel %vm1460, %v383, %v711
        %v1471 = vsel %vm1460, %v385, %v713
        %v1472 = vsel %vm1460, %v386, %v715
        %v1473 = vsel %vm1460, %v388, %v717
        %v1474 = vsel %vm1460, %v389, %v719
        %v1475 = vsel %vm1460, %v391, %v721
        %v1476 = vsel %vm1460, %v392, %v723
        %v1477 = vsel %vm1460, %v394, %v725
        %v1478 = vsel %vm1460, %v395, %v727
        %v1479 = vsel %vm1460, %v397, %v729
        %v1480 = vsel %vm1460, %v398, %v731
        %v1481 = vsel %vm1460, %v400, %v733
        %v1482 = vsel %vm1460, %v401, %v735
        %v1483 = vsel %vm1460, %v403, %v737
        %v1484 = vsel %vm1460, %v404, %v739
        %v1485 = vsel %vm1460, %v406, %v741
        %v1486 = vsel %vm1460, %v407, %v743
        %v1487 = vsel %vm1460, %v409, %v745
        %v1488 = vsel %vm1460, %v410, %v747
        %v1489 = vsel %vm1460, %v412, %v749
        %v1490 = vsel %vm1460, %v413, %v751
        %v1491 = vsel %vm1460, %v415, %v753
        %v1492 = vsel %vm1460, %v416, %v755
        %vm1493 = vcmask 64512
        %v1494 = vsel %vm1493, %v1461, %v789
        %v1495 = vsel %vm1493, %v1462, %v791
        %v1496 = vsel %vm1493, %v1463, %v793
        %v1497 = vsel %vm1493, %v1464, %v795
        %v1498 = vsel %vm1493, %v1465, %v797
        %v1499 = vsel %vm1493, %v1466, %v799
        %v1500 = vsel %vm1493, %v1467, %v801
        %v1501 = vsel %vm1493, %v1468, %v803
        %v1502 = vsel %vm1493, %v1469, %v805
        %v1503 = vsel %vm1493, %v1470, %v807
        %v1504 = vsel %vm1493, %v1471, %v809
        %v1505 = vsel %vm1493, %v1472, %v811
        %v1506 = vsel %vm1493, %v1473, %v813
        %v1507 = vsel %vm1493, %v1474, %v815
        %v1508 = vsel %vm1493, %v1475, %v817
        %v1509 = vsel %vm1493, %v1476, %v819
        %v1510 = vsel %vm1493, %v1477, %v821
        %v1511 = vsel %vm1493, %v1478, %v823
        %v1512 = vsel %vm1493, %v1479, %v825
        %v1513 = vsel %vm1493, %v1480, %v827
        %v1514 = vsel %vm1493, %v1481, %v829
        %v1515 = vsel %vm1493, %v1482, %v831
        %v1516 = vsel %vm1493, %v1483, %v833
        %v1517 = vsel %vm1493, %v1484, %v835
        %v1518 = vsel %vm1493, %v1485, %v837
        %v1519 = vsel %vm1493, %v1486, %v839
        %v1520 = vsel %vm1493, %v1487, %v841
        %v1521 = vsel %vm1493, %v1488, %v843
        %v1522 = vsel %vm1493, %v1489, %v845
        %v1523 = vsel %vm1493, %v1490, %v847
        %v1524 = vsel %vm1493, %v1491, %v849
        %v1525 = vsel %vm1493, %v1492, %v851
        %vm1526 = vcmask 97280
        %v1527 = vsel %vm1526, %v1494, %v885
        %v1528 = vsel %vm1526, %v1495, %v887
        %v1529 = vsel %vm1526, %v1496, %v889
        %v1530 = vsel %vm1526, %v1497, %v891
        %v1531 = vsel %vm1526, %v1498, %v893
        %v1532 = vsel %vm1526, %v1499, %v895
        %v1533 = vsel %vm1526, %v1500, %v897
        %v1534 = vsel %vm1526, %v1501, %v899
        %v1535 = vsel %vm1526, %v1502, %v901
        %v1536 = vsel %vm1526, %v1503, %v903
        %v1537 = vsel %vm1526, %v1504, %v905
        %v1538 = vsel %vm1526, %v1505, %v907
        %v1539 = vsel %vm1526, %v1506, %v909
        %v1540 = vsel %vm1526, %v1507, %v911
        %v1541 = vsel %vm1526, %v1508, %v913
        %v1542 = vsel %vm1526, %v1509, %v915
        %v1543 = vsel %vm1526, %v1510, %v917
        %v1544 = vsel %vm1526, %v1511, %v919
        %v1545 = vsel %vm1526, %v1512, %v921
        %v1546 = vsel %vm1526, %v1513, %v923
        %v1547 = vsel %vm1526, %v1514, %v925
        %v1548 = vsel %vm1526, %v1515, %v927
        %v1549 = vsel %vm1526, %v1516, %v929
        %v1550 = vsel %vm1526, %v1517, %v931
        %v1551 = vsel %vm1526, %v1518, %v933
        %v1552 = vsel %vm1526, %v1519, %v935
        %v1553 = vsel %vm1526, %v1520, %v937
        %v1554 = vsel %vm1526, %v1521, %v939
        %v1555 = vsel %vm1526, %v1522, %v941
        %v1556 = vsel %vm1526, %v1523, %v943
        %v1557 = vsel %vm1526, %v1524, %v945
        %v1558 = vsel %vm1526, %v1525, %v947
        %vm1559 = vcmask 130048
        %v1560 = vsel %vm1559, %v1527, %v981
        %v1561 = vsel %vm1559, %v1528, %v983
        %v1562 = vsel %vm1559, %v1529, %v985
        %v1563 = vsel %vm1559, %v1530, %v987
        %v1564 = vsel %vm1559, %v1531, %v989
        %v1565 = vsel %vm1559, %v1532, %v991
        %v1566 = vsel %vm1559, %v1533, %v993
        %v1567 = vsel %vm1559, %v1534, %v995
        %v1568 = vsel %vm1559, %v1535, %v997
        %v1569 = vsel %vm1559, %v1536, %v999
        %v1570 = vsel %vm1559, %v1537, %v1001
        %v1571 = vsel %vm1559, %v1538, %v1003
        %v1572 = vsel %vm1559, %v1539, %v1005
        %v1573 = vsel %vm1559, %v1540, %v1007
        %v1574 = vsel %vm1559, %v1541, %v1009
        %v1575 = vsel %vm1559, %v1542, %v1011
        %v1576 = vsel %vm1559, %v1543, %v1013
        %v1577 = vsel %vm1559, %v1544, %v1015
        %v1578 = vsel %vm1559, %v1545, %v1017
        %v1579 = vsel %vm1559, %v1546, %v1019
        %v1580 = vsel %vm1559, %v1547, %v1021
        %v1581 = vsel %vm1559, %v1548, %v1023
        %v1582 = vsel %vm1559, %v1549, %v1025
        %v1583 = vsel %vm1559, %v1550, %v1027
        %v1584 = vsel %vm1559, %v1551, %v1029
        %v1585 = vsel %vm1559, %v1552, %v1031
        %v1586 = vsel %vm1559, %v1553, %v1033
        %v1587 = vsel %vm1559, %v1554, %v1035
        %v1588 = vsel %vm1559, %v1555, %v1037
        %v1589 = vsel %vm1559, %v1556, %v1039
        %v1590 = vsel %vm1559, %v1557, %v1041
        %v1591 = vsel %vm1559, %v1558, %v1043
        %vm1592 = vcmask 162816
        %v1593 = vsel %vm1592, %v1560, %v1077
        %v1594 = vsel %vm1592, %v1561, %v1079
        %v1595 = vsel %vm1592, %v1562, %v1081
        %v1596 = vsel %vm1592, %v1563, %v1083
        %v1597 = vsel %vm1592, %v1564, %v1085
        %v1598 = vsel %vm1592, %v1565, %v1087
        %v1599 = vsel %vm1592, %v1566, %v1089
        %v1600 = vsel %vm1592, %v1567, %v1091
        %v1601 = vsel %vm1592, %v1568, %v1093
        %v1602 = vsel %vm1592, %v1569, %v1095
        %v1603 = vsel %vm1592, %v1570, %v1097
        %v1604 = vsel %vm1592, %v1571, %v1099
        %v1605 = vsel %vm1592, %v1572, %v1101
        %v1606 = vsel %vm1592, %v1573, %v1103
        %v1607 = vsel %vm1592, %v1574, %v1105
        %v1608 = vsel %vm1592, %v1575, %v1107
        %v1609 = vsel %vm1592, %v1576, %v1109
        %v1610 = vsel %vm1592, %v1577, %v1111
        %v1611 = vsel %vm1592, %v1578, %v1113
        %v1612 = vsel %vm1592, %v1579, %v1115
        %v1613 = vsel %vm1592, %v1580, %v1117
        %v1614 = vsel %vm1592, %v1581, %v1119
        %v1615 = vsel %vm1592, %v1582, %v1121
        %v1616 = vsel %vm1592, %v1583, %v1123
        %v1617 = vsel %vm1592, %v1584, %v1125
        %v1618 = vsel %vm1592, %v1585, %v1127
        %v1619 = vsel %vm1592, %v1586, %v1129
        %v1620 = vsel %vm1592, %v1587, %v1131
        %v1621 = vsel %vm1592, %v1588, %v1133
        %v1622 = vsel %vm1592, %v1589, %v1135
        %v1623 = vsel %vm1592, %v1590, %v1137
        %v1624 = vsel %vm1592, %v1591, %v1139
        %vm1625 = vcmask 195584
        %v1626 = vsel %vm1625, %v1593, %v1173
        %v1627 = vsel %vm1625, %v1594, %v1175
        %v1628 = vsel %vm1625, %v1595, %v1177
        %v1629 = vsel %vm1625, %v1596, %v1179
        %v1630 = vsel %vm1625, %v1597, %v1181
        %v1631 = vsel %vm1625, %v1598, %v1183
        %v1632 = vsel %vm1625, %v1599, %v1185
        %v1633 = vsel %vm1625, %v1600, %v1187
        %v1634 = vsel %vm1625, %v1601, %v1189
        %v1635 = vsel %vm1625, %v1602, %v1191
        %v1636 = vsel %vm1625, %v1603, %v1193
        %v1637 = vsel %vm1625, %v1604, %v1195
        %v1638 = vsel %vm1625, %v1605, %v1197
        %v1639 = vsel %vm1625, %v1606, %v1199
        %v1640 = vsel %vm1625, %v1607, %v1201
        %v1641 = vsel %vm1625, %v1608, %v1203
        %v1642 = vsel %vm1625, %v1609, %v1205
        %v1643 = vsel %vm1625, %v1610, %v1207
        %v1644 = vsel %vm1625, %v1611, %v1209
        %v1645 = vsel %vm1625, %v1612, %v1211
        %v1646 = vsel %vm1625, %v1613, %v1213
        %v1647 = vsel %vm1625, %v1614, %v1215
        %v1648 = vsel %vm1625, %v1615, %v1217
        %v1649 = vsel %vm1625, %v1616, %v1219
        %v1650 = vsel %vm1625, %v1617, %v1221
        %v1651 = vsel %vm1625, %v1618, %v1223
        %v1652 = vsel %vm1625, %v1619, %v1225
        %v1653 = vsel %vm1625, %v1620, %v1227
        %v1654 = vsel %vm1625, %v1621, %v1229
        %v1655 = vsel %vm1625, %v1622, %v1231
        %v1656 = vsel %vm1625, %v1623, %v1233
        %v1657 = vsel %vm1625, %v1624, %v1235
        %vm1658 = vcmask 228352
        %v1659 = vsel %vm1658, %v1626, %v1269
        %v1660 = vsel %vm1658, %v1627, %v1271
        %v1661 = vsel %vm1658, %v1628, %v1273
        %v1662 = vsel %vm1658, %v1629, %v1275
        %v1663 = vsel %vm1658, %v1630, %v1277
        %v1664 = vsel %vm1658, %v1631, %v1279
        %v1665 = vsel %vm1658, %v1632, %v1281
        %v1666 = vsel %vm1658, %v1633, %v1283
        %v1667 = vsel %vm1658, %v1634, %v1285
        %v1668 = vsel %vm1658, %v1635, %v1287
        %v1669 = vsel %vm1658, %v1636, %v1289
        %v1670 = vsel %vm1658, %v1637, %v1291
        %v1671 = vsel %vm1658, %v1638, %v1293
        %v1672 = vsel %vm1658, %v1639, %v1295
        %v1673 = vsel %vm1658, %v1640, %v1297
        %v1674 = vsel %vm1658, %v1641, %v1299
        %v1675 = vsel %vm1658, %v1642, %v1301
        %v1676 = vsel %vm1658, %v1643, %v1303
        %v1677 = vsel %vm1658, %v1644, %v1305
        %v1678 = vsel %vm1658, %v1645, %v1307
        %v1679 = vsel %vm1658, %v1646, %v1309
        %v1680 = vsel %vm1658, %v1647, %v1311
        %v1681 = vsel %vm1658, %v1648, %v1313
        %v1682 = vsel %vm1658, %v1649, %v1315
        %v1683 = vsel %vm1658, %v1650, %v1317
        %v1684 = vsel %vm1658, %v1651, %v1319
        %v1685 = vsel %vm1658, %v1652, %v1321
        %v1686 = vsel %vm1658, %v1653, %v1323
        %v1687 = vsel %vm1658, %v1654, %v1325
        %v1688 = vsel %vm1658, %v1655, %v1327
        %v1689 = vsel %vm1658, %v1656, %v1329
        %v1690 = vsel %vm1658, %v1657, %v1331
        %vm1691 = vcmask 261120
        %v1692 = vsel %vm1691, %v1659, %v1365
        %v1693 = vsel %vm1691, %v1660, %v1367
        %v1694 = vsel %vm1691, %v1661, %v1369
        %v1695 = vsel %vm1691, %v1662, %v1371
        %v1696 = vsel %vm1691, %v1663, %v1373
        %v1697 = vsel %vm1691, %v1664, %v1375
        %v1698 = vsel %vm1691, %v1665, %v1377
        %v1699 = vsel %vm1691, %v1666, %v1379
        %v1700 = vsel %vm1691, %v1667, %v1381
        %v1701 = vsel %vm1691, %v1668, %v1383
        %v1702 = vsel %vm1691, %v1669, %v1385
        %v1703 = vsel %vm1691, %v1670, %v1387
        %v1704 = vsel %vm1691, %v1671, %v1389
        %v1705 = vsel %vm1691, %v1672, %v1391
        %v1706 = vsel %vm1691, %v1673, %v1393
        %v1707 = vsel %vm1691, %v1674, %v1395
        %v1708 = vsel %vm1691, %v1675, %v1397
        %v1709 = vsel %vm1691, %v1676, %v1399
        %v1710 = vsel %vm1691, %v1677, %v1401
        %v1711 = vsel %vm1691, %v1678, %v1403
        %v1712 = vsel %vm1691, %v1679, %v1405
        %v1713 = vsel %vm1691, %v1680, %v1407
        %v1714 = vsel %vm1691, %v1681, %v1409
        %v1715 = vsel %vm1691, %v1682, %v1411
        %v1716 = vsel %vm1691, %v1683, %v1413
        %v1717 = vsel %vm1691, %v1684, %v1415
        %v1718 = vsel %vm1691, %v1685, %v1417
        %v1719 = vsel %vm1691, %v1686, %v1419
        %v1720 = vsel %vm1691, %v1687, %v1421
        %v1721 = vsel %vm1691, %v1688, %v1423
        %v1722 = vsel %vm1691, %v1689, %v1425
        %v1723 = vsel %vm1691, %v1690, %v1427
        %v1724 = vpack.c.bf16 %v1693, %v1692
        %v1725 = vpack.c.bf16 %v1695, %v1694
        %v1726 = vpack.c.bf16 %v1697, %v1696
        %v1727 = vpack.c.bf16 %v1699, %v1698
        %v1728 = vpack.c.bf16 %v1701, %v1700
        %v1729 = vpack.c.bf16 %v1703, %v1702
        %v1730 = vpack.c.bf16 %v1705, %v1704
        %v1731 = vpack.c.bf16 %v1707, %v1706
        %v1732 = vpack.c.bf16 %v1709, %v1708
        %v1733 = vpack.c.bf16 %v1711, %v1710
        %v1734 = vpack.c.bf16 %v1713, %v1712
        %v1735 = vpack.c.bf16 %v1715, %v1714
        %v1736 = vpack.c.bf16 %v1717, %v1716
        %v1737 = vpack.c.bf16 %v1719, %v1718
        %v1738 = vpack.c.bf16 %v1721, %v1720
        %v1739 = vpack.c.bf16 %v1723, %v1722
        %v1740 = vld [vmem:[%s1] sm:$0xf]
        %v1741 = vld [vmem:[%s1 + $0x4] sm:$0xf]
        %v1742 = vld [vmem:[%s1 + $0x8] sm:$0xf]
        %v1743 = vld [vmem:[%s1 + $0xc] sm:$0xf]
        %v1744 = vld [vmem:[%s1 + $0x10] sm:$0x3]
        %v1750 = vunpack.c.l.b16 %v1740
        %v1751 = vunpack.c.l.b16 %v1741
        %v1752 = vunpack.c.l.b16 %v1742
        %v1753 = vunpack.c.l.b16 %v1743
        %v1754 = vunpack.c.l.b16 %v1744
        %v1755 = vpack.c.b16 %v1751, %v1750
        %v1756 = vpack.c.b16 %v1753, %v1752
        %v1757 = vpack.c.b16 %v1754, %v1754
        %vm1760 = vcmask 293888
        %v1762 = vsel %vm1760, %v1724, 0
        %v1765 = vsel %vm1760, %v1725, 0
        %v1768 = vsel %vm1760, %v1726, 0
        %v1771 = vsel %vm1760, %v1727, 0
        %v1774 = vsel %vm1760, %v1728, 0
        %v1777 = vsel %vm1760, %v1729, 0
        %v1780 = vsel %vm1760, %v1730, 0
        %v1783 = vsel %vm1760, %v1731, 0
        %v1786 = vsel %vm1760, %v1732, 0
        %v1789 = vsel %vm1760, %v1733, 0
        %v1792 = vsel %vm1760, %v1734, 0
        %v1795 = vsel %vm1760, %v1735, 0
        %v1798 = vsel %vm1760, %v1736, 0
        %v1801 = vsel %vm1760, %v1737, 0
        %v1804 = vsel %vm1760, %v1738, 0
        %v1807 = vsel %vm1760, %v1739, 0
        %vm1809 = vcmask 1041408
        %v1811 = vsel %vm1809, %v1757, 0
        %1813 = vmatprep.subr.bf16.mxu0 0
        %1814 = vmatpush1.bf16.msra.mxu0 %v1755
        %1815 = vmatprep.subr.bf16.mxu0 0
        %1816 = vmatpush1.bf16.msra.mxu0 %v1756
        %1817 = vmatprep.subr.bf16.mxu0 0
        %1818 = vmatpush1.bf16.msra.mxu0 %v1811
        %1819 = vmatprep.subr.bf16.mxu0 0
        %1820 = vmatpush1.bf16.msra.mxu0 0
        %1821 = vmatprep.subr.bf16.mxu0 0
        %1822 = vmatpush1.bf16.msra.mxu0 0
        %1823 = vmatprep.subr.bf16.mxu0 0
        %1824 = vmatpush1.bf16.msra.mxu0 0
        %1825 = vmatprep.subr.bf16.mxu0 0
        %1826 = vmatpush1.bf16.msra.mxu0 0
        %1827 = vmatprep.subr.bf16.mxu0 0
        %1828 = vmatpush1.bf16.msra.mxu0 0
        %1829 = vmatprep.subr.bf16.mxu0 0
        %1830 = vmatpush1.bf16.msra.mxu0 0
        %1831 = vmatprep.subr.bf16.mxu0 0
        %1832 = vmatpush1.bf16.msra.mxu0 0
        %1833 = vmatprep.subr.bf16.mxu0 0
        %1834 = vmatpush1.bf16.msra.mxu0 0
        %1835 = vmatprep.subr.bf16.mxu0 0
        %1836 = vmatpush1.bf16.msra.mxu0 0
        %1837 = vmatprep.subr.bf16.mxu0 0
        %1838 = vmatpush1.bf16.msra.mxu0 0
        %1839 = vmatprep.subr.bf16.mxu0 0
        %1840 = vmatpush1.bf16.msra.mxu0 0
        %1841 = vmatprep.subr.bf16.mxu0 0
        %1842 = vmatpush1.bf16.msra.mxu0 0
        %1843 = vmatprep.subr.bf16.mxu0 0
        %1844 = vmatpush1.bf16.msra.mxu0 0
        %1845 = vmatprep.mubr.bf16.mxu0 0
        %1846 = vmatmul.mubr.bf16.gmra.mrb[0].mxu0 %v1762
        %v1847 = vpop.f32.mrb[0].mxu0
        %v1848 = vadd.f32 0.0, %v1847
        %v1849 = vpop.f32.mrb[0].mxu0
        %v1850 = vpop.f32.mrb[0].mxu0
        %v1851 = vadd.f32 0.0, %v1850
        %v1852 = vpop.f32.mrb[0].mxu0
        %1853 = vmatprep.mubr.bf16.mxu0 0
        %1854 = vmatmul.mubr.bf16.gmra.mrb[0].mxu0 %v1765
        %v1855 = vpop.f32.mrb[0].mxu0
        %v1856 = vadd.f32 0.0, %v1855
        %v1857 = vpop.f32.mrb[0].mxu0
        %v1858 = vpop.f32.mrb[0].mxu0
        %v1859 = vadd.f32 0.0, %v1858
        %v1860 = vpop.f32.mrb[0].mxu0
        %1861 = vmatprep.mubr.bf16.mxu0 0
        %1862 = vmatmul.mubr.bf16.gmra.mrb[0].mxu0 %v1768
        %v1863 = vpop.f32.mrb[0].mxu0
        %v1864 = vadd.f32 0.0, %v1863
        %v1865 = vpop.f32.mrb[0].mxu0
        %v1866 = vpop.f32.mrb[0].mxu0
        %v1867 = vadd.f32 0.0, %v1866
        %v1868 = vpop.f32.mrb[0].mxu0
        %1869 = vmatprep.mubr.bf16.mxu0 0
        %1870 = vmatmul.mubr.bf16.gmra.mrb[0].mxu0 %v1771
        %v1871 = vpop.f32.mrb[0].mxu0
        %v1872 = vadd.f32 0.0, %v1871
        %v1873 = vpop.f32.mrb[0].mxu0
        %v1874 = vpop.f32.mrb[0].mxu0
        %v1875 = vadd.f32 0.0, %v1874
        %v1876 = vpop.f32.mrb[0].mxu0
        %1877 = vmatprep.mubr.bf16.mxu0 0
        %1878 = vmatmul.mubr.bf16.gmra.mrb[0].mxu0 %v1774
        %v1879 = vpop.f32.mrb[0].mxu0
        %v1880 = vadd.f32 0.0, %v1879
        %v1881 = vpop.f32.mrb[0].mxu0
        %v1882 = vpop.f32.mrb[0].mxu0
        %v1883 = vadd.f32 0.0, %v1882
        %v1884 = vpop.f32.mrb[0].mxu0
        %1885 = vmatprep.mubr.bf16.mxu0 0
        %1886 = vmatmul.mubr.bf16.gmra.mrb[0].mxu0 %v1777
        %v1887 = vpop.f32.mrb[0].mxu0
        %v1888 = vadd.f32 0.0, %v1887
        %v1889 = vpop.f32.mrb[0].mxu0
        %v1890 = vpop.f32.mrb[0].mxu0
        %v1891 = vadd.f32 0.0, %v1890
        %v1892 = vpop.f32.mrb[0].mxu0
        %1893 = vmatprep.mubr.bf16.mxu0 0
        %1894 = vmatmul.mubr.bf16.gmra.mrb[0].mxu0 %v1780
        %v1895 = vpop.f32.mrb[0].mxu0
        %v1896 = vadd.f32 0.0, %v1895
        %v1897 = vpop.f32.mrb[0].mxu0
        %v1898 = vpop.f32.mrb[0].mxu0
        %v1899 = vadd.f32 0.0, %v1898
        %v1900 = vpop.f32.mrb[0].mxu0
        %1901 = vmatprep.mubr.bf16.mxu0 0
        %1902 = vmatmul.mubr.bf16.gmra.mrb[0].mxu0 %v1783
        %v1903 = vpop.f32.mrb[0].mxu0
        %v1904 = vadd.f32 0.0, %v1903
        %v1905 = vpop.f32.mrb[0].mxu0
        %v1906 = vpop.f32.mrb[0].mxu0
        %v1907 = vadd.f32 0.0, %v1906
        %v1908 = vpop.f32.mrb[0].mxu0
        %1909 = vmatprep.mubr.bf16.mxu0 0
        %1910 = vmatmul.mubr.bf16.gmra.mrb[0].mxu0 %v1786
        %v1911 = vpop.f32.mrb[0].mxu0
        %v1912 = vadd.f32 0.0, %v1911
        %v1913 = vpop.f32.mrb[0].mxu0
        %v1914 = vpop.f32.mrb[0].mxu0
        %v1915 = vadd.f32 0.0, %v1914
        %v1916 = vpop.f32.mrb[0].mxu0
        %1917 = vmatprep.mubr.bf16.mxu0 0
        %1918 = vmatmul.mubr.bf16.gmra.mrb[0].mxu0 %v1789
        %v1919 = vpop.f32.mrb[0].mxu0
        %v1920 = vadd.f32 0.0, %v1919
        %v1921 = vpop.f32.mrb[0].mxu0
        %v1922 = vpop.f32.mrb[0].mxu0
        %v1923 = vadd.f32 0.0, %v1922
        %v1924 = vpop.f32.mrb[0].mxu0
        %1925 = vmatprep.mubr.bf16.mxu0 0
        %1926 = vmatmul.mubr.bf16.gmra.mrb[0].mxu0 %v1792
        %v1927 = vpop.f32.mrb[0].mxu0
        %v1928 = vadd.f32 0.0, %v1927
        %v1929 = vpop.f32.mrb[0].mxu0
        %v1930 = vpop.f32.mrb[0].mxu0
        %v1931 = vadd.f32 0.0, %v1930
        %v1932 = vpop.f32.mrb[0].mxu0
        %1933 = vmatprep.mubr.bf16.mxu0 0
        %1934 = vmatmul.mubr.bf16.gmra.mrb[0].mxu0 %v1795
        %v1935 = vpop.f32.mrb[0].mxu0
        %v1936 = vadd.f32 0.0, %v1935
        %v1937 = vpop.f32.mrb[0].mxu0
        %v1938 = vpop.f32.mrb[0].mxu0
        %v1939 = vadd.f32 0.0, %v1938
        %v1940 = vpop.f32.mrb[0].mxu0
        %1941 = vmatprep.mubr.bf16.mxu0 0
        %1942 = vmatmul.mubr.bf16.gmra.mrb[0].mxu0 %v1798
        %v1943 = vpop.f32.mrb[0].mxu0
        %v1944 = vadd.f32 0.0, %v1943
        %v1945 = vpop.f32.mrb[0].mxu0
        %v1946 = vpop.f32.mrb[0].mxu0
        %v1947 = vadd.f32 0.0, %v1946
        %v1948 = vpop.f32.mrb[0].mxu0
        %1949 = vmatprep.mubr.bf16.mxu0 0
        %1950 = vmatmul.mubr.bf16.gmra.mrb[0].mxu0 %v1801
        %v1951 = vpop.f32.mrb[0].mxu0
        %v1952 = vadd.f32 0.0, %v1951
        %v1953 = vpop.f32.mrb[0].mxu0
        %v1954 = vpop.f32.mrb[0].mxu0
        %v1955 = vadd.f32 0.0, %v1954
        %v1956 = vpop.f32.mrb[0].mxu0
        %1957 = vmatprep.mubr.bf16.mxu0 0
        %1958 = vmatmul.mubr.bf16.gmra.mrb[0].mxu0 %v1804
        %v1959 = vpop.f32.mrb[0].mxu0
        %v1960 = vadd.f32 0.0, %v1959
        %v1961 = vpop.f32.mrb[0].mxu0
        %v1962 = vpop.f32.mrb[0].mxu0
        %v1963 = vadd.f32 0.0, %v1962
        %v1964 = vpop.f32.mrb[0].mxu0
        %1965 = vmatprep.mubr.bf16.mxu0 0
        %1966 = vmatmul.mubr.bf16.gmra.mrb[0].mxu0 %v1807
        %v1967 = vpop.f32.mrb[0].mxu0
        %v1968 = vadd.f32 0.0, %v1967
        %v1969 = vpop.f32.mrb[0].mxu0
        %v1970 = vpop.f32.mrb[0].mxu0
        %v1971 = vadd.f32 0.0, %v1970
        %v1972 = vpop.f32.mrb[0].mxu0
        %1973 = vdwg.mxu0
        %v1974 = vld [vmem:[%s2] sm:$0x1]
        %v1976 = vlaneseq
        %v1977 = vshrl.u32 %v1976, 7
        %v1978 = vsub.s32 0, %v1977
        %v1979 = vrot.slane %v1974, %v1978
        %v1981 = vmul.f32 %v1848, %v1979
        %v1982 = vmul.f32 %v1851, %v1979
        %v1983 = vmul.f32 %v1856, %v1979
        %v1984 = vmul.f32 %v1859, %v1979
        %v1985 = vmul.f32 %v1864, %v1979
        %v1986 = vmul.f32 %v1867, %v1979
        %v1987 = vmul.f32 %v1872, %v1979
        %v1988 = vmul.f32 %v1875, %v1979
        %v1989 = vmul.f32 %v1880, %v1979
        %v1990 = vmul.f32 %v1883, %v1979
        %v1991 = vmul.f32 %v1888, %v1979
        %v1992 = vmul.f32 %v1891, %v1979
        %v1993 = vmul.f32 %v1896, %v1979
        %v1994 = vmul.f32 %v1899, %v1979
        %v1995 = vmul.f32 %v1904, %v1979
        %v1996 = vmul.f32 %v1907, %v1979
        %v1997 = vmul.f32 %v1912, %v1979
        %v1998 = vmul.f32 %v1915, %v1979
        %v1999 = vmul.f32 %v1920, %v1979
        %v2000 = vmul.f32 %v1923, %v1979
        %v2001 = vmul.f32 %v1928, %v1979
        %v2002 = vmul.f32 %v1931, %v1979
        %v2003 = vmul.f32 %v1936, %v1979
        %v2004 = vmul.f32 %v1939, %v1979
        %v2005 = vmul.f32 %v1944, %v1979
        %v2006 = vmul.f32 %v1947, %v1979
        %v2007 = vmul.f32 %v1952, %v1979
        %v2008 = vmul.f32 %v1955, %v1979
        %v2009 = vmul.f32 %v1960, %v1979
        %v2010 = vmul.f32 %v1963, %v1979
        %v2011 = vmul.f32 %v1968, %v1979
        %v2012 = vmul.f32 %v1971, %v1979
        %v2013 = vld [vmem:[%s3] sm:$0x1]
        %v2015 = vlaneseq
        %v2016 = vshrl.u32 %v2015, 7
        %v2017 = vsub.s32 0, %v2016
        %v2018 = vrot.slane %v2013, %v2017
        %v2020 = vadd.f32 %v1981, %v2018
        %v2021 = vadd.f32 %v1982, %v2018
        %v2022 = vadd.f32 %v1983, %v2018
        %v2023 = vadd.f32 %v1984, %v2018
        %v2024 = vadd.f32 %v1985, %v2018
        %v2025 = vadd.f32 %v1986, %v2018
        %v2026 = vadd.f32 %v1987, %v2018
        %v2027 = vadd.f32 %v1988, %v2018
        %v2028 = vadd.f32 %v1989, %v2018
        %v2029 = vadd.f32 %v1990, %v2018
        %v2030 = vadd.f32 %v1991, %v2018
        %v2031 = vadd.f32 %v1992, %v2018
        %v2032 = vadd.f32 %v1993, %v2018
        %v2033 = vadd.f32 %v1994, %v2018
        %v2034 = vadd.f32 %v1995, %v2018
        %v2035 = vadd.f32 %v1996, %v2018
        %v2036 = vadd.f32 %v1997, %v2018
        %v2037 = vadd.f32 %v1998, %v2018
        %v2038 = vadd.f32 %v1999, %v2018
        %v2039 = vadd.f32 %v2000, %v2018
        %v2040 = vadd.f32 %v2001, %v2018
        %v2041 = vadd.f32 %v2002, %v2018
        %v2042 = vadd.f32 %v2003, %v2018
        %v2043 = vadd.f32 %v2004, %v2018
        %v2044 = vadd.f32 %v2005, %v2018
        %v2045 = vadd.f32 %v2006, %v2018
        %v2046 = vadd.f32 %v2007, %v2018
        %v2047 = vadd.f32 %v2008, %v2018
        %v2048 = vadd.f32 %v2009, %v2018
        %v2049 = vadd.f32 %v2010, %v2018
        %v2050 = vadd.f32 %v2011, %v2018
        %v2051 = vadd.f32 %v2012, %v2018
        %v2052 = vmax.f32 %v2020, 0.0
        %v2053 = vmax.f32 %v2021, 0.0
        %v2054 = vmax.f32 %v2022, 0.0
        %v2055 = vmax.f32 %v2023, 0.0
        %v2056 = vmax.f32 %v2024, 0.0
        %v2057 = vmax.f32 %v2025, 0.0
        %v2058 = vmax.f32 %v2026, 0.0
        %v2059 = vmax.f32 %v2027, 0.0
        %v2060 = vmax.f32 %v2028, 0.0
        %v2061 = vmax.f32 %v2029, 0.0
        %v2062 = vmax.f32 %v2030, 0.0
        %v2063 = vmax.f32 %v2031, 0.0
        %v2064 = vmax.f32 %v2032, 0.0
        %v2065 = vmax.f32 %v2033, 0.0
        %v2066 = vmax.f32 %v2034, 0.0
        %v2067 = vmax.f32 %v2035, 0.0
        %v2068 = vmax.f32 %v2036, 0.0
        %v2069 = vmax.f32 %v2037, 0.0
        %v2070 = vmax.f32 %v2038, 0.0
        %v2071 = vmax.f32 %v2039, 0.0
        %v2072 = vmax.f32 %v2040, 0.0
        %v2073 = vmax.f32 %v2041, 0.0
        %v2074 = vmax.f32 %v2042, 0.0
        %v2075 = vmax.f32 %v2043, 0.0
        %v2076 = vmax.f32 %v2044, 0.0
        %v2077 = vmax.f32 %v2045, 0.0
        %v2078 = vmax.f32 %v2046, 0.0
        %v2079 = vmax.f32 %v2047, 0.0
        %v2080 = vmax.f32 %v2048, 0.0
        %v2081 = vmax.f32 %v2049, 0.0
        %v2082 = vmax.f32 %v2050, 0.0
        %v2083 = vmax.f32 %v2051, 0.0
        %v2084 = vpack.c.bf16 %v2053, %v2052
        %v2085 = vpack.c.bf16 %v2055, %v2054
        %v2086 = vpack.c.bf16 %v2057, %v2056
        %v2087 = vpack.c.bf16 %v2059, %v2058
        %v2088 = vpack.c.bf16 %v2061, %v2060
        %v2089 = vpack.c.bf16 %v2063, %v2062
        %v2090 = vpack.c.bf16 %v2065, %v2064
        %v2091 = vpack.c.bf16 %v2067, %v2066
        %v2092 = vpack.c.bf16 %v2069, %v2068
        %v2093 = vpack.c.bf16 %v2071, %v2070
        %v2094 = vpack.c.bf16 %v2073, %v2072
        %v2095 = vpack.c.bf16 %v2075, %v2074
        %v2096 = vpack.c.bf16 %v2077, %v2076
        %v2097 = vpack.c.bf16 %v2079, %v2078
        %v2098 = vpack.c.bf16 %v2081, %v2080
        %v2099 = vpack.c.bf16 %v2083, %v2082
        %v2116 = vunpack.c.l.b16 %v2084
        %v2117 = vunpack.c.h.b16 %v2084
        %v2118 = vunpack.c.l.b16 %v2085
        %v2119 = vunpack.c.h.b16 %v2085
        %v2120 = vunpack.c.l.b16 %v2086
        %v2121 = vunpack.c.h.b16 %v2086
        %v2122 = vunpack.c.l.b16 %v2087
        %v2123 = vunpack.c.h.b16 %v2087
        %v2124 = vunpack.c.l.b16 %v2088
        %v2125 = vunpack.c.h.b16 %v2088
        %v2126 = vunpack.c.l.b16 %v2089
        %v2127 = vunpack.c.h.b16 %v2089
        %v2128 = vunpack.c.l.b16 %v2090
        %v2129 = vunpack.c.h.b16 %v2090
        %v2130 = vunpack.c.l.b16 %v2091
        %v2131 = vunpack.c.h.b16 %v2091
        %v2132 = vunpack.c.l.b16 %v2092
        %v2133 = vunpack.c.h.b16 %v2092
        %v2134 = vunpack.c.l.b16 %v2093
        %v2135 = vunpack.c.h.b16 %v2093
        %v2136 = vunpack.c.l.b16 %v2094
        %v2137 = vunpack.c.h.b16 %v2094
        %v2138 = vunpack.c.l.b16 %v2095
        %v2139 = vunpack.c.h.b16 %v2095
        %v2140 = vunpack.c.l.b16 %v2096
        %v2141 = vunpack.c.h.b16 %v2096
        %v2142 = vunpack.c.l.b16 %v2097
        %v2143 = vunpack.c.h.b16 %v2097
        %v2144 = vunpack.c.l.b16 %v2098
        %v2145 = vunpack.c.h.b16 %v2098
        %v2146 = vunpack.c.l.b16 %v2099
        %v2147 = vunpack.c.h.b16 %v2099
        %v2148 = vpack.c.b16 %v2116, %v2116
        %v2149 = vpack.c.b16 %v2117, %v2117
        %v2150 = vpack.c.b16 %v2118, %v2118
        %v2151 = vpack.c.b16 %v2119, %v2119
        %v2152 = vpack.c.b16 %v2120, %v2120
        %v2153 = vpack.c.b16 %v2121, %v2121
        %v2154 = vpack.c.b16 %v2122, %v2122
        %v2155 = vpack.c.b16 %v2123, %v2123
        %v2156 = vpack.c.b16 %v2124, %v2124
        %v2157 = vpack.c.b16 %v2125, %v2125
        %v2158 = vpack.c.b16 %v2126, %v2126
        %v2159 = vpack.c.b16 %v2127, %v2127
        %v2160 = vpack.c.b16 %v2128, %v2128
        %v2161 = vpack.c.b16 %v2129, %v2129
        %v2162 = vpack.c.b16 %v2130, %v2130
        %v2163 = vpack.c.b16 %v2131, %v2131
        %v2164 = vpack.c.b16 %v2132, %v2132
        %v2165 = vpack.c.b16 %v2133, %v2133
        %v2166 = vpack.c.b16 %v2134, %v2134
        %v2167 = vpack.c.b16 %v2135, %v2135
        %v2168 = vpack.c.b16 %v2136, %v2136
        %v2169 = vpack.c.b16 %v2137, %v2137
        %v2170 = vpack.c.b16 %v2138, %v2138
        %v2171 = vpack.c.b16 %v2139, %v2139
        %v2172 = vpack.c.b16 %v2140, %v2140
        %v2173 = vpack.c.b16 %v2141, %v2141
        %v2174 = vpack.c.b16 %v2142, %v2142
        %v2175 = vpack.c.b16 %v2143, %v2143
        %v2176 = vpack.c.b16 %v2144, %v2144
        %v2177 = vpack.c.b16 %v2145, %v2145
        %v2178 = vpack.c.b16 %v2146, %v2146
        %v2179 = vpack.c.b16 %v2147, %v2147
        %2212 = vst [vmem:[%s302] sm:$0xf] %v2148
        %2213 = vst [vmem:[%s302 + $0x4] sm:$0xf] %v2149
        %2214 = vst [vmem:[%s302 + $0x8] sm:$0xf] %v2150
        %2215 = vst [vmem:[%s302 + $0xc] sm:$0xf] %v2151
        %2216 = vst [vmem:[%s302 + $0x10] sm:$0xf] %v2152
        %2217 = vst [vmem:[%s302 + $0x14] sm:$0xf] %v2153
        %2218 = vst [vmem:[%s302 + $0x18] sm:$0xf] %v2154
        %2219 = vst [vmem:[%s302 + $0x1c] sm:$0xf] %v2155
        %2220 = vst [vmem:[%s302 + $0x20] sm:$0xf] %v2156
        %2221 = vst [vmem:[%s302 + $0x24] sm:$0xf] %v2157
        %2222 = vst [vmem:[%s302 + $0x28] sm:$0xf] %v2158
        %2223 = vst [vmem:[%s302 + $0x2c] sm:$0xf] %v2159
        %2224 = vst [vmem:[%s302 + $0x30] sm:$0xf] %v2160
        %2225 = vst [vmem:[%s302 + $0x34] sm:$0xf] %v2161
        %2226 = vst [vmem:[%s302 + $0x38] sm:$0xf] %v2162
        %2227 = vst [vmem:[%s302 + $0x3c] sm:$0xf] %v2163
        %2228 = vst [vmem:[%s302 + $0x40] sm:$0xf] %v2164
        %2229 = vst [vmem:[%s302 + $0x44] sm:$0xf] %v2165
        %2230 = vst [vmem:[%s302 + $0x48] sm:$0xf] %v2166
        %2231 = vst [vmem:[%s302 + $0x4c] sm:$0xf] %v2167
        %2232 = vst [vmem:[%s302 + $0x50] sm:$0xf] %v2168
        %2233 = vst [vmem:[%s302 + $0x54] sm:$0xf] %v2169
        %2234 = vst [vmem:[%s302 + $0x58] sm:$0xf] %v2170
        %2235 = vst [vmem:[%s302 + $0x5c] sm:$0xf] %v2171
        %2236 = vst [vmem:[%s302 + $0x60] sm:$0xf] %v2172
        %2237 = vst [vmem:[%s302 + $0x64] sm:$0xf] %v2173
        %2238 = vst [vmem:[%s302 + $0x68] sm:$0xf] %v2174
        %2239 = vst [vmem:[%s302 + $0x6c] sm:$0xf] %v2175
        %2240 = vst [vmem:[%s302 + $0x70] sm:$0xf] %v2176
        %2241 = vst [vmem:[%s302 + $0x74] sm:$0xf] %v2177
        %2242 = vst [vmem:[%s302 + $0x78] sm:$0xf] %v2178
        %2243 = vst [vmem:[%s302 + $0x7c] sm:$0xf] %v2179
        %v2244 = vpack.c.bf16 %v482, %v480
        %v2245 = vpack.c.bf16 %v487, %v485
        %v2246 = vpack.c.bf16 %v492, %v490
        %v2247 = vpack.c.bf16 %v497, %v495
        %v2248 = vpack.c.bf16 %v502, %v500
        %v2249 = vpack.c.bf16 %v507, %v505
        %v2250 = vpack.c.bf16 %v512, %v510
        %v2251 = vpack.c.bf16 %v517, %v515
        %v2252 = vpack.c.bf16 %v522, %v520
        %v2253 = vpack.c.bf16 %v527, %v525
        %v2254 = vpack.c.bf16 %v532, %v530
        %v2255 = vpack.c.bf16 %v537, %v535
        %v2256 = vpack.c.bf16 %v542, %v540
        %v2257 = vpack.c.bf16 %v547, %v545
        %v2258 = vpack.c.bf16 %v552, %v550
        %v2259 = vpack.c.bf16 %v641, %v639
        %v2260 = vld [vmem:[%s4] sm:$0x3]
        %v2262 = vsel %vm1460, %v2244, 0
        %v2265 = vsel %vm1460, %v2245, 0
        %v2268 = vsel %vm1460, %v2246, 0
        %v2271 = vsel %vm1460, %v2247, 0
        %v2274 = vsel %vm1460, %v2248, 0
        %v2277 = vsel %vm1460, %v2249, 0
        %v2280 = vsel %vm1460, %v2250, 0
        %v2283 = vsel %vm1460, %v2251, 0
        %v2286 = vsel %vm1460, %v2252, 0
        %v2289 = vsel %vm1460, %v2253, 0
        %v2292 = vsel %vm1460, %v2254, 0
        %v2295 = vsel %vm1460, %v2255, 0
        %v2298 = vsel %vm1460, %v2256, 0
        %v2301 = vsel %vm1460, %v2257, 0
        %v2304 = vsel %vm1460, %v2258, 0
        %v2307 = vsel %vm1460, %v2259, 0
        %v2310 = vsel %vm1809, %v2260, 0
        %2312 = vmatprep.subr.bf16.mxu0 0
        %2313 = vmatpush1.bf16.msra.mxu0 %v2310
        %2314 = vmatprep.subr.bf16.mxu0 0
        %2315 = vmatpush1.bf16.msra.mxu0 0
        %2316 = vmatprep.subr.bf16.mxu0 0
        %2317 = vmatpush1.bf16.msra.mxu0 0
        %2318 = vmatprep.subr.bf16.mxu0 0
        %2319 = vmatpush1.bf16.msra.mxu0 0
        %2320 = vmatprep.subr.bf16.mxu0 0
        %2321 = vmatpush1.bf16.msra.mxu0 0
        %2322 = vmatprep.subr.bf16.mxu0 0
        %2323 = vmatpush1.bf16.msra.mxu0 0
        %2324 = vmatprep.subr.bf16.mxu0 0
        %2325 = vmatpush1.bf16.msra.mxu0 0
        %2326 = vmatprep.subr.bf16.mxu0 0
        %2327 = vmatpush1.bf16.msra.mxu0 0
        %2328 = vmatprep.subr.bf16.mxu0 0
        %2329 = vmatpush1.bf16.msra.mxu0 0
        %2330 = vmatprep.subr.bf16.mxu0 0
        %2331 = vmatpush1.bf16.msra.mxu0 0
        %2332 = vmatprep.subr.bf16.mxu0 0
        %2333 = vmatpush1.bf16.msra.mxu0 0
        %2334 = vmatprep.subr.bf16.mxu0 0
        %2335 = vmatpush1.bf16.msra.mxu0 0
        %2336 = vmatprep.subr.bf16.mxu0 0
        %2337 = vmatpush1.bf16.msra.mxu0 0
        %2338 = vmatprep.subr.bf16.mxu0 0
        %2339 = vmatpush1.bf16.msra.mxu0 0
        %2340 = vmatprep.subr.bf16.mxu0 0
        %2341 = vmatpush1.bf16.msra.mxu0 0
        %2342 = vmatprep.subr.bf16.mxu0 0
        %2343 = vmatpush1.bf16.msra.mxu0 0
        %2344 = vmatprep.mubr.bf16.mxu0 0
        %2345 = vmatmul.mubr.bf16.gmra.mrb[0].mxu0 %v2262
        %v2346 = vpop.f32.mrb[0].mxu0
        %v2347 = vadd.f32 0.0, %v2346
        %v2348 = vpop.f32.mrb[0].mxu0
        %v2349 = vpop.f32.mrb[0].mxu0
        %v2350 = vadd.f32 0.0, %v2349
        %v2351 = vpop.f32.mrb[0].mxu0
        %2352 = vmatprep.mubr.bf16.mxu0 0
        %2353 = vmatmul.mubr.bf16.gmra.mrb[0].mxu0 %v2265
        %v2354 = vpop.f32.mrb[0].mxu0
        %v2355 = vadd.f32 0.0, %v2354
        %v2356 = vpop.f32.mrb[0].mxu0
        %v2357 = vpop.f32.mrb[0].mxu0
        %v2358 = vadd.f32 0.0, %v2357
        %v2359 = vpop.f32.mrb[0].mxu0
        %2360 = vmatprep.mubr.bf16.mxu0 0
        %2361 = vmatmul.mubr.bf16.gmra.mrb[0].mxu0 %v2268
        %v2362 = vpop.f32.mrb[0].mxu0
        %v2363 = vadd.f32 0.0, %v2362
        %v2364 = vpop.f32.mrb[0].mxu0
        %v2365 = vpop.f32.mrb[0].mxu0
        %v2366 = vadd.f32 0.0, %v2365
        %v2367 = vpop.f32.mrb[0].mxu0
        %2368 = vmatprep.mubr.bf16.mxu0 0
        %2369 = vmatmul.mubr.bf16.gmra.mrb[0].mxu0 %v2271
        %v2370 = vpop.f32.mrb[0].mxu0
        %v2371 = vadd.f32 0.0, %v2370
        %v2372 = vpop.f32.mrb[0].mxu0
        %v2373 = vpop.f32.mrb[0].mxu0
        %v2374 = vadd.f32 0.0, %v2373
        %v2375 = vpop.f32.mrb[0].mxu0
        %2376 = vmatprep.mubr.bf16.mxu0 0
        %2377 = vmatmul.mubr.bf16.gmra.mrb[0].mxu0 %v2274
        %v2378 = vpop.f32.mrb[0].mxu0
        %v2379 = vadd.f32 0.0, %v2378
        %v2380 = vpop.f32.mrb[0].mxu0
        %v2381 = vpop.f32.mrb[0].mxu0
        %v2382 = vadd.f32 0.0, %v2381
        %v2383 = vpop.f32.mrb[0].mxu0
        %2384 = vmatprep.mubr.bf16.mxu0 0
        %2385 = vmatmul.mubr.bf16.gmra.mrb[0].mxu0 %v2277
        %v2386 = vpop.f32.mrb[0].mxu0
        %v2387 = vadd.f32 0.0, %v2386
        %v2388 = vpop.f32.mrb[0].mxu0
        %v2389 = vpop.f32.mrb[0].mxu0
        %v2390 = vadd.f32 0.0, %v2389
        %v2391 = vpop.f32.mrb[0].mxu0
        %2392 = vmatprep.mubr.bf16.mxu0 0
        %2393 = vmatmul.mubr.bf16.gmra.mrb[0].mxu0 %v2280
        %v2394 = vpop.f32.mrb[0].mxu0
        %v2395 = vadd.f32 0.0, %v2394
        %v2396 = vpop.f32.mrb[0].mxu0
        %v2397 = vpop.f32.mrb[0].mxu0
        %v2398 = vadd.f32 0.0, %v2397
        %v2399 = vpop.f32.mrb[0].mxu0
        %2400 = vmatprep.mubr.bf16.mxu0 0
        %2401 = vmatmul.mubr.bf16.gmra.mrb[0].mxu0 %v2283
        %v2402 = vpop.f32.mrb[0].mxu0
        %v2403 = vadd.f32 0.0, %v2402
        %v2404 = vpop.f32.mrb[0].mxu0
        %v2405 = vpop.f32.mrb[0].mxu0
        %v2406 = vadd.f32 0.0, %v2405
        %v2407 = vpop.f32.mrb[0].mxu0
        %2408 = vmatprep.mubr.bf16.mxu0 0
        %2409 = vmatmul.mubr.bf16.gmra.mrb[0].mxu0 %v2286
        %v2410 = vpop.f32.mrb[0].mxu0
        %v2411 = vadd.f32 0.0, %v2410
        %v2412 = vpop.f32.mrb[0].mxu0
        %v2413 = vpop.f32.mrb[0].mxu0
        %v2414 = vadd.f32 0.0, %v2413
        %v2415 = vpop.f32.mrb[0].mxu0
        %2416 = vmatprep.mubr.bf16.mxu0 0
        %2417 = vmatmul.mubr.bf16.gmra.mrb[0].mxu0 %v2289
        %v2418 = vpop.f32.mrb[0].mxu0
        %v2419 = vadd.f32 0.0, %v2418
        %v2420 = vpop.f32.mrb[0].mxu0
        %v2421 = vpop.f32.mrb[0].mxu0
        %v2422 = vadd.f32 0.0, %v2421
        %v2423 = vpop.f32.mrb[0].mxu0
        %2424 = vmatprep.mubr.bf16.mxu0 0
        %2425 = vmatmul.mubr.bf16.gmra.mrb[0].mxu0 %v2292
        %v2426 = vpop.f32.mrb[0].mxu0
        %v2427 = vadd.f32 0.0, %v2426
        %v2428 = vpop.f32.mrb[0].mxu0
        %v2429 = vpop.f32.mrb[0].mxu0
        %v2430 = vadd.f32 0.0, %v2429
        %v2431 = vpop.f32.mrb[0].mxu0
        %2432 = vmatprep.mubr.bf16.mxu0 0
        %2433 = vmatmul.mubr.bf16.gmra.mrb[0].mxu0 %v2295
        %v2434 = vpop.f32.mrb[0].mxu0
        %v2435 = vadd.f32 0.0, %v2434
        %v2436 = vpop.f32.mrb[0].mxu0
        %v2437 = vpop.f32.mrb[0].mxu0
        %v2438 = vadd.f32 0.0, %v2437
        %v2439 = vpop.f32.mrb[0].mxu0
        %2440 = vmatprep.mubr.bf16.mxu0 0
        %2441 = vmatmul.mubr.bf16.gmra.mrb[0].mxu0 %v2298
        %v2442 = vpop.f32.mrb[0].mxu0
        %v2443 = vadd.f32 0.0, %v2442
        %v2444 = vpop.f32.mrb[0].mxu0
        %v2445 = vpop.f32.mrb[0].mxu0
        %v2446 = vadd.f32 0.0, %v2445
        %v2447 = vpop.f32.mrb[0].mxu0
        %2448 = vmatprep.mubr.bf16.mxu0 0
        %2449 = vmatmul.mubr.bf16.gmra.mrb[0].mxu0 %v2301
        %v2450 = vpop.f32.mrb[0].mxu0
        %v2451 = vadd.f32 0.0, %v2450
        %v2452 = vpop.f32.mrb[0].mxu0
        %v2453 = vpop.f32.mrb[0].mxu0
        %v2454 = vadd.f32 0.0, %v2453
        %v2455 = vpop.f32.mrb[0].mxu0
        %2456 = vmatprep.mubr.bf16.mxu0 0
        %2457 = vmatmul.mubr.bf16.gmra.mrb[0].mxu0 %v2304
        %v2458 = vpop.f32.mrb[0].mxu0
        %v2459 = vadd.f32 0.0, %v2458
        %v2460 = vpop.f32.mrb[0].mxu0
        %v2461 = vpop.f32.mrb[0].mxu0
        %v2462 = vadd.f32 0.0, %v2461
        %v2463 = vpop.f32.mrb[0].mxu0
        %2464 = vmatprep.mubr.bf16.mxu0 0
        %2465 = vmatmul.mubr.bf16.gmra.mrb[0].mxu0 %v2307
        %v2466 = vpop.f32.mrb[0].mxu0
        %v2467 = vadd.f32 0.0, %v2466
        %v2468 = vpop.f32.mrb[0].mxu0
        %v2469 = vpop.f32.mrb[0].mxu0
        %v2470 = vadd.f32 0.0, %v2469
        %v2471 = vpop.f32.mrb[0].mxu0
        %2472 = vdwg.mxu0
        %v2473 = vld [vmem:[%s5] sm:$0x1]
        %v2475 = vlaneseq
        %v2476 = vshrl.u32 %v2475, 7
        %v2477 = vsub.s32 0, %v2476
        %v2478 = vrot.slane %v2473, %v2477
        %v2480 = vmul.f32 %v2347, %v2478
        %v2481 = vmul.f32 %v2350, %v2478
        %v2482 = vmul.f32 %v2355, %v2478
        %v2483 = vmul.f32 %v2358, %v2478
        %v2484 = vmul.f32 %v2363, %v2478
        %v2485 = vmul.f32 %v2366, %v2478
        %v2486 = vmul.f32 %v2371, %v2478
        %v2487 = vmul.f32 %v2374, %v2478
        %v2488 = vmul.f32 %v2379, %v2478
        %v2489 = vmul.f32 %v2382, %v2478
        %v2490 = vmul.f32 %v2387, %v2478
        %v2491 = vmul.f32 %v2390, %v2478
        %v2492 = vmul.f32 %v2395, %v2478
        %v2493 = vmul.f32 %v2398, %v2478
        %v2494 = vmul.f32 %v2403, %v2478
        %v2495 = vmul.f32 %v2406, %v2478
        %v2496 = vmul.f32 %v2411, %v2478
        %v2497 = vmul.f32 %v2414, %v2478
        %v2498 = vmul.f32 %v2419, %v2478
        %v2499 = vmul.f32 %v2422, %v2478
        %v2500 = vmul.f32 %v2427, %v2478
        %v2501 = vmul.f32 %v2430, %v2478
        %v2502 = vmul.f32 %v2435, %v2478
        %v2503 = vmul.f32 %v2438, %v2478
        %v2504 = vmul.f32 %v2443, %v2478
        %v2505 = vmul.f32 %v2446, %v2478
        %v2506 = vmul.f32 %v2451, %v2478
        %v2507 = vmul.f32 %v2454, %v2478
        %v2508 = vmul.f32 %v2459, %v2478
        %v2509 = vmul.f32 %v2462, %v2478
        %v2510 = vmul.f32 %v2467, %v2478
        %v2511 = vmul.f32 %v2470, %v2478
        %v2512 = vld [vmem:[%s6] sm:$0x1]
        %v2514 = vlaneseq
        %v2515 = vshrl.u32 %v2514, 7
        %v2516 = vsub.s32 0, %v2515
        %v2517 = vrot.slane %v2512, %v2516
        %v2519 = vadd.f32 %v2480, %v2517
        %v2520 = vadd.f32 %v2481, %v2517
        %v2521 = vadd.f32 %v2482, %v2517
        %v2522 = vadd.f32 %v2483, %v2517
        %v2523 = vadd.f32 %v2484, %v2517
        %v2524 = vadd.f32 %v2485, %v2517
        %v2525 = vadd.f32 %v2486, %v2517
        %v2526 = vadd.f32 %v2487, %v2517
        %v2527 = vadd.f32 %v2488, %v2517
        %v2528 = vadd.f32 %v2489, %v2517
        %v2529 = vadd.f32 %v2490, %v2517
        %v2530 = vadd.f32 %v2491, %v2517
        %v2531 = vadd.f32 %v2492, %v2517
        %v2532 = vadd.f32 %v2493, %v2517
        %v2533 = vadd.f32 %v2494, %v2517
        %v2534 = vadd.f32 %v2495, %v2517
        %v2535 = vadd.f32 %v2496, %v2517
        %v2536 = vadd.f32 %v2497, %v2517
        %v2537 = vadd.f32 %v2498, %v2517
        %v2538 = vadd.f32 %v2499, %v2517
        %v2539 = vadd.f32 %v2500, %v2517
        %v2540 = vadd.f32 %v2501, %v2517
        %v2541 = vadd.f32 %v2502, %v2517
        %v2542 = vadd.f32 %v2503, %v2517
        %v2543 = vadd.f32 %v2504, %v2517
        %v2544 = vadd.f32 %v2505, %v2517
        %v2545 = vadd.f32 %v2506, %v2517
        %v2546 = vadd.f32 %v2507, %v2517
        %v2547 = vadd.f32 %v2508, %v2517
        %v2548 = vadd.f32 %v2509, %v2517
        %v2549 = vadd.f32 %v2510, %v2517
        %v2550 = vadd.f32 %v2511, %v2517
        %v2551 = vpack.c.bf16 %v2520, %v2519
        %v2552 = vpack.c.bf16 %v2522, %v2521
        %v2553 = vpack.c.bf16 %v2524, %v2523
        %v2554 = vpack.c.bf16 %v2526, %v2525
        %v2555 = vpack.c.bf16 %v2528, %v2527
        %v2556 = vpack.c.bf16 %v2530, %v2529
        %v2557 = vpack.c.bf16 %v2532, %v2531
        %v2558 = vpack.c.bf16 %v2534, %v2533
        %v2559 = vpack.c.bf16 %v2536, %v2535
        %v2560 = vpack.c.bf16 %v2538, %v2537
        %v2561 = vpack.c.bf16 %v2540, %v2539
        %v2562 = vpack.c.bf16 %v2542, %v2541
        %v2563 = vpack.c.bf16 %v2544, %v2543
        %v2564 = vpack.c.bf16 %v2546, %v2545
        %v2565 = vpack.c.bf16 %v2548, %v2547
        %v2566 = vpack.c.bf16 %v2550, %v2549
        %v2583 = vunpack.c.l.b16 %v2551
        %v2584 = vunpack.c.h.b16 %v2551
        %v2585 = vunpack.c.l.b16 %v2552
        %v2586 = vunpack.c.h.b16 %v2552
        %v2587 = vunpack.c.l.b16 %v2553
        %v2588 = vunpack.c.h.b16 %v2553
        %v2589 = vunpack.c.l.b16 %v2554
        %v2590 = vunpack.c.h.b16 %v2554
        %v2591 = vunpack.c.l.b16 %v2555
        %v2592 = vunpack.c.h.b16 %v2555
        %v2593 = vunpack.c.l.b16 %v2556
        %v2594 = vunpack.c.h.b16 %v2556
        %v2595 = vunpack.c.l.b16 %v2557
        %v2596 = vunpack.c.h.b16 %v2557
        %v2597 = vunpack.c.l.b16 %v2558
        %v2598 = vunpack.c.h.b16 %v2558
        %v2599 = vunpack.c.l.b16 %v2559
        %v2600 = vunpack.c.h.b16 %v2559
        %v2601 = vunpack.c.l.b16 %v2560
        %v2602 = vunpack.c.h.b16 %v2560
        %v2603 = vunpack.c.l.b16 %v2561
        %v2604 = vunpack.c.h.b16 %v2561
        %v2605 = vunpack.c.l.b16 %v2562
        %v2606 = vunpack.c.h.b16 %v2562
        %v2607 = vunpack.c.l.b16 %v2563
        %v2608 = vunpack.c.h.b16 %v2563
        %v2609 = vunpack.c.l.b16 %v2564
        %v2610 = vunpack.c.h.b16 %v2564
        %v2611 = vunpack.c.l.b16 %v2565
        %v2612 = vunpack.c.h.b16 %v2565
        %v2613 = vunpack.c.l.b16 %v2566
        %v2614 = vunpack.c.h.b16 %v2566
        %v2615 = vpack.c.b16 %v2583, %v2583
        %v2616 = vpack.c.b16 %v2584, %v2584
        %v2617 = vpack.c.b16 %v2585, %v2585
        %v2618 = vpack.c.b16 %v2586, %v2586
        %v2619 = vpack.c.b16 %v2587, %v2587
        %v2620 = vpack.c.b16 %v2588, %v2588
        %v2621 = vpack.c.b16 %v2589, %v2589
        %v2622 = vpack.c.b16 %v2590, %v2590
        %v2623 = vpack.c.b16 %v2591, %v2591
        %v2624 = vpack.c.b16 %v2592, %v2592
        %v2625 = vpack.c.b16 %v2593, %v2593
        %v2626 = vpack.c.b16 %v2594, %v2594
        %v2627 = vpack.c.b16 %v2595, %v2595
        %v2628 = vpack.c.b16 %v2596, %v2596
        %v2629 = vpack.c.b16 %v2597, %v2597
        %v2630 = vpack.c.b16 %v2598, %v2598
        %v2631 = vpack.c.b16 %v2599, %v2599
        %v2632 = vpack.c.b16 %v2600, %v2600
        %v2633 = vpack.c.b16 %v2601, %v2601
        %v2634 = vpack.c.b16 %v2602, %v2602
        %v2635 = vpack.c.b16 %v2603, %v2603
        %v2636 = vpack.c.b16 %v2604, %v2604
        %v2637 = vpack.c.b16 %v2605, %v2605
        %v2638 = vpack.c.b16 %v2606, %v2606
        %v2639 = vpack.c.b16 %v2607, %v2607
        %v2640 = vpack.c.b16 %v2608, %v2608
        %v2641 = vpack.c.b16 %v2609, %v2609
        %v2642 = vpack.c.b16 %v2610, %v2610
        %v2643 = vpack.c.b16 %v2611, %v2611
        %v2644 = vpack.c.b16 %v2612, %v2612
        %v2645 = vpack.c.b16 %v2613, %v2613
        %v2646 = vpack.c.b16 %v2614, %v2614
        %2679 = vst [vmem:[%s309] sm:$0xf] %v2615
        %2680 = vst [vmem:[%s309 + $0x4] sm:$0xf] %v2616
        %2681 = vst [vmem:[%s309 + $0x8] sm:$0xf] %v2617
        %2682 = vst [vmem:[%s309 + $0xc] sm:$0xf] %v2618
        %2683 = vst [vmem:[%s309 + $0x10] sm:$0xf] %v2619
        %2684 = vst [vmem:[%s309 + $0x14] sm:$0xf] %v2620
        %2685 = vst [vmem:[%s309 + $0x18] sm:$0xf] %v2621
        %2686 = vst [vmem:[%s309 + $0x1c] sm:$0xf] %v2622
        %2687 = vst [vmem:[%s309 + $0x20] sm:$0xf] %v2623
        %2688 = vst [vmem:[%s309 + $0x24] sm:$0xf] %v2624
        %2689 = vst [vmem:[%s309 + $0x28] sm:$0xf] %v2625
        %2690 = vst [vmem:[%s309 + $0x2c] sm:$0xf] %v2626
        %2691 = vst [vmem:[%s309 + $0x30] sm:$0xf] %v2627
        %2692 = vst [vmem:[%s309 + $0x34] sm:$0xf] %v2628
        %2693 = vst [vmem:[%s309 + $0x38] sm:$0xf] %v2629
        %2694 = vst [vmem:[%s309 + $0x3c] sm:$0xf] %v2630
        %2695 = vst [vmem:[%s309 + $0x40] sm:$0xf] %v2631
        %2696 = vst [vmem:[%s309 + $0x44] sm:$0xf] %v2632
        %2697 = vst [vmem:[%s309 + $0x48] sm:$0xf] %v2633
        %2698 = vst [vmem:[%s309 + $0x4c] sm:$0xf] %v2634
        %2699 = vst [vmem:[%s309 + $0x50] sm:$0xf] %v2635
        %2700 = vst [vmem:[%s309 + $0x54] sm:$0xf] %v2636
        %2701 = vst [vmem:[%s309 + $0x58] sm:$0xf] %v2637
        %2702 = vst [vmem:[%s309 + $0x5c] sm:$0xf] %v2638
        %2703 = vst [vmem:[%s309 + $0x60] sm:$0xf] %v2639
        %2704 = vst [vmem:[%s309 + $0x64] sm:$0xf] %v2640
        %2705 = vst [vmem:[%s309 + $0x68] sm:$0xf] %v2641
        %2706 = vst [vmem:[%s309 + $0x6c] sm:$0xf] %v2642
        %2707 = vst [vmem:[%s309 + $0x70] sm:$0xf] %v2643
        %2708 = vst [vmem:[%s309 + $0x74] sm:$0xf] %v2644
        %2709 = vst [vmem:[%s309 + $0x78] sm:$0xf] %v2645
        %2710 = vst [vmem:[%s309 + $0x7c] sm:$0xf] %v2646
        %s2711 = sand.u32 %s186, 1
        %s2712 = scalar_lea.sflag [#allocation3], %s2711
        %s2713 = sand.u32 %s186, 1
        %s2714 = smul.addr %s2713, 128
        %s2715 = scalar_lea.vmem [#allocation2], %s2714
        %s2716 = sand.u32 %s212, 1
        %s2717 = scalar_lea.sflag [#allocation5], %s2716
        %s2718 = sand.u32 %s212, 1
        %s2719 = smul.addr %s2718, 128
        %s2720 = scalar_lea.vmem [#allocation4], %s2719
        // Predicated region
        $region49: #{tpu_custom_call.1} parent=47 // pred_check
          %p2721 = pneg %p196
        $region50: #{tpu_custom_call.1} parent=47 // pred_check_branch
          %2723 = sbr.rel (%p2721) target = $region52
        $region51: #{tpu_custom_call.1} parent=47 // pred_region
          %s2725 = ssub.s32 2048, 2048
          %2726 = vsyncadd %s2712, %s2725
          %s2727 = smul.addr %s26, 32
          %s2728 = smul.addr %s2727, 64
          %s2729 = scalar_lea.hbm %s7, %s2728
          %s2730 = sshll.u32 %s2715, 4
          %s2731 = int_to_ptr.vmem [resolvable:$true] %s2730
          %2736 = dma.vmem_to_hbm [thread:$0]  %s2731, 2048, %s2729, %s2712, 64, 64, 4
        $region52: #{tpu_custom_call.1} parent=47 // pred_fallthru
          _
        // Predicated region
        $region53: #{tpu_custom_call.1} parent=47 // pred_check
          %p2737 = pneg %p222
        $region54: #{tpu_custom_call.1} parent=47 // pred_check_branch
          %2739 = sbr.rel (%p2737) target = $region56
        $region55: #{tpu_custom_call.1} parent=47 // pred_region
          %s2741 = ssub.s32 2048, 2048
          %2742 = vsyncadd %s2717, %s2741
          %s2743 = smul.addr %s26, 32
          %s2744 = smul.addr %s2743, 64
          %s2745 = scalar_lea.hbm %s8, %s2744
          %s2746 = sshll.u32 %s2720, 4
          %s2747 = int_to_ptr.vmem [resolvable:$true] %s2746
          %2752 = dma.vmem_to_hbm [thread:$0]  %s2747, 2048, %s2745, %s2717, 64, 64, 4
        $region56: #{tpu_custom_call.1} parent=47 // pred_fallthru
          _
      $region48: #{tpu_custom_call.1} parent=5 // pred_fallthru
        _
      %p2753 = scmp.le.s32.totalorder 2, %s21
      // Predicated region
      $region57: #{tpu_custom_call.1} parent=5 // pred_check
        %p2754 = pneg %p2753
      $region58: #{tpu_custom_call.1} parent=5 // pred_check_branch
        %2756 = sbr.rel (%p2754) target = $region60
      $region59: #{tpu_custom_call.1} parent=5 // pred_region
        %s2757 = ssub.s32 %s21, 2
        // Predicated region
        $region61: #{tpu_custom_call.1} parent=59 // pred_check
          %p2758 = pneg %p202
        $region62: #{tpu_custom_call.1} parent=59 // pred_check_branch
          %2760 = sbr.rel (%p2758) target = $region64
        $region63: #{tpu_custom_call.1} parent=59 // pred_region
          %s2761 = sand.u32 %s187, 1
          %s2762 = scalar_lea.sflag [#allocation3], %s2761
          %s2763 = sand.u32 %s187, 1
          %s2764 = smul.addr %s2763, 128
          %s2765 = scalar_lea.vmem [#allocation2], %s2764
          %2766 = dma.done %s2762, 2048
        $region64: #{tpu_custom_call.1} parent=59 // pred_fallthru
          _
        // Predicated region
        $region65: #{tpu_custom_call.1} parent=59 // pred_check
          %p2767 = pneg %p228
        $region66: #{tpu_custom_call.1} parent=59 // pred_check_branch
          %2769 = sbr.rel (%p2767) target = $region68
        $region67: #{tpu_custom_call.1} parent=59 // pred_region
          %s2770 = sand.u32 %s213, 1
          %s2771 = scalar_lea.sflag [#allocation5], %s2770
          %s2772 = sand.u32 %s213, 1
          %s2773 = smul.addr %s2772, 128
          %s2774 = scalar_lea.vmem [#allocation4], %s2773
          %2775 = dma.done %s2771, 2048
        $region68: #{tpu_custom_call.1} parent=59 // pred_fallthru
          _
      $region60: #{tpu_custom_call.1} parent=5 // pred_fallthru
        _
    $region6: #{tpu_custom_call.1} parent=1 // loop_footer
      %s25 = sadd.s32 1, %s21
    $region7: #{tpu_custom_call.1} parent=1 // loop_footer_branch
      %20 = sbr.rel target = $region3
    $region8: #{tpu_custom_call.1} parent=1 // loop_exit
      _
    %2776 = vsyncpa [#allocation3], 1
    %s2777 = scalar_lea.sflag [#allocation3], 1
    %2778 = vsyncpa %s2777, 1
    %2779 = vsyncpa [#allocation5], 1
    %s2780 = scalar_lea.sflag [#allocation5], 1
    %2781 = vsyncpa %s2780, 1

</llo_original>
